<compile_context>
chip_gen: v7x
topology: tpu7x:2x2x1
jax: 0.10.0
libtpu: 0.0.40
codegen_flags: <defaults>
</compile_context>

<pallas_src>
import math

import jax
import jax.numpy as jnp
from jax.experimental import pallas as pl
from jax.experimental.pallas import tpu as pltpu

HIDDEN_DIMS = [200, 100, 20, 100, 200]
BN_EPS = 1e-5
LEAKY_SLOPE = 0.1            # nn.LeakyReLU(0.1)


def _round_up(n, m):
    return ((n + m - 1) // m) * m


# Padded (lane-dense) hidden dims: 256, 128, 128, 128, 256.
P1, P2, P3, P4, P5 = (_round_up(d, 128) for d in HIDDEN_DIMS)


# ----------------------------------------------------------------------------
# Parameter construction / preparation
# ----------------------------------------------------------------------------
def init_params(key, input_size, hidden_dims=HIDDEN_DIMS):
    """Deterministic PyTorch-Linear-style init; weights stored (in, out), f32."""
    dims = [input_size] + list(hidden_dims) + [input_size]
    keys = jax.random.split(key, len(dims) - 1)
    ws, bs = [], []
    for k, din, dout in zip(keys, dims[:-1], dims[1:]):
        kw, kb = jax.random.split(k)
        bound = 1.0 / (din ** 0.5)
        ws.append(jax.random.uniform(kw, (din, dout), jnp.float32, -bound, bound))
        bs.append(jax.random.uniform(kb, (1, dout), jnp.float32, -bound, bound))
    bn_dim = min(hidden_dims)
    bn = (jnp.ones((1, bn_dim), jnp.float32),    # gamma
          jnp.zeros((1, bn_dim), jnp.float32),   # beta
          jnp.zeros((1, bn_dim), jnp.float32),   # running_mean
          jnp.ones((1, bn_dim), jnp.float32))    # running_var
    return ws, bs, bn


def prepare_params(ws, bs, bn, input_size):
    """Fold eval-mode BN into layer 3, zero-pad to x128, pack into few operands."""
    ws = list(ws)
    bs = list(bs)

    # Fold BatchNorm1d(20) (running stats, eps=1e-5) into the embedding Linear.
    gamma, beta, rmean, rvar = bn
    scale = gamma * jax.lax.rsqrt(rvar + BN_EPS)
    ws[2] = ws[2] * scale
    bs[2] = (bs[2] - rmean) * scale + beta

    D = input_size
    Dp = _round_up(D, 128)
    dims = [D] + list(HIDDEN_DIMS) + [D]
    pdims = [Dp, P1, P2, P3, P4, P5, Dp]

    def pad_w(w, i):
        din, dout = dims[i], dims[i + 1]
        return jnp.zeros((pdims[i], pdims[i + 1]), jnp.float32).at[:din, :dout].set(w)

    pw = [pad_w(w, i) for i, w in enumerate(ws)]

    w1 = pw[0].astype(jnp.bfloat16)                 # (Dp, P1)
    w3 = pw[2]                                      # (P2, P3) f32 (BN folded)
    w6 = pw[5].astype(jnp.bfloat16)                 # (P5, Dp)

    # Pack W2 / W4 / W5 into one bf16 buffer; carved with static slices in-kernel.
    wmid = jnp.zeros((max(P1, P3, P4), P2 + P4 + P5), jnp.float32)
    wmid = wmid.at[:P1, :P2].set(pw[1])                       # W2 (256,128)
    wmid = wmid.at[:P3, P2:P2 + P4].set(pw[3])                # W4 (128,128)
    wmid = wmid.at[:P4, P2 + P4:P2 + P4 + P5].set(pw[4])      # W5 (128,256)
    wmid = wmid.astype(jnp.bfloat16)

    # Biases stay f32 (accuracy; < 100 KiB total), one per row of a packed buffer.
    bcols = max(Dp, P1, P5)
    bias_pack = jnp.zeros((6, bcols), jnp.float32)
    for i, (b, dout) in enumerate(zip(bs, dims[1:])):
        bias_pack = bias_pack.at[i, :dout].set(b[0])

    return dict(w1=w1, wmid=wmid, w3=w3, w6=w6, bias_pack=bias_pack,
                Dp=Dp, bcols=bcols)


# ----------------------------------------------------------------------------
# Wrapper + kernel
# ----------------------------------------------------------------------------
def organ_autoencoder(x, params):
    """x: (B, C, H, W) float32 NCHW.  Returns an array of the same shape."""
    B = x.shape[0]
    D = math.prod(x.shape[1:])
    Dp, bcols = params["Dp"], params["bcols"]
    w1, wmid, w3, w6 = params["w1"], params["wmid"], params["w3"], params["w6"]

    # Flatten + torch.nan_to_num + column zero-pad in plain XLA (one fused pass).
    xf = jnp.nan_to_num(x.reshape(B, D).astype(jnp.float32))
    if Dp != D:
        xf = jnp.pad(xf, ((0, 0), (0, Dp - D)))

    # set_bounds lo/hi hoisted out of the kernel: a cheap (B,Dp)->(1,Dp) reduce.
    lo = jnp.min(xf, axis=0, keepdims=True)
    hi = jnp.max(xf, axis=0, keepdims=True)
    lohi = jnp.zeros((2, bcols), jnp.float32).at[:, :Dp].set(
        jnp.concatenate([lo, hi], axis=0))
    vecs = jnp.concatenate([params["bias_pack"], lohi], axis=0)   # (8, bcols) f32

    # Batch tiling: 256-row tiles feed the 256-wide MXU (v6e/v7x); tiny batches
    # use a single round_up(B, 8) tile.  Padded rows are sliced off at the end.
    tb = 256 if B >= 256 else _round_up(B, 8)
    Bp = _round_up(B, tb)
    if Bp != B:
        xf = jnp.pad(xf, ((0, Bp - B), (0, 0)))
    grid = (Bp // tb,)

    def kernel(x_ref, vecs_ref, w1_ref, wmid_ref, w3_ref, w6_ref, out_ref):
        f32, bf16 = jnp.float32, jnp.bfloat16
        b1 = vecs_ref[0:1, 0:P1]
        b2 = vecs_ref[1:2, 0:P2]
        b3 = vecs_ref[2:3, 0:P3]
        b4 = vecs_ref[3:4, 0:P4]
        b5 = vecs_ref[4:5, 0:P5]
        b6 = vecs_ref[5:6, 0:Dp]
        lo_v = vecs_ref[6:7, 0:Dp]
        hi_v = vecs_ref[7:8, 0:Dp]

        x_t = x_ref[...]                        # already nan_to_num'd f32
        # Dropout(p=0.5) on the flattened input: identity in eval mode.
        h = jnp.dot(x_t.astype(bf16), w1_ref[...], preferred_element_type=f32) + b1
        h = jnp.maximum(h, 0.0)                 # Linear(D,200)   + ReLU
        h = jnp.dot(h.astype(bf16), wmid_ref[0:P1, 0:P2],
                    preferred_element_type=f32) + b2
        h = jnp.maximum(h, 0.0)                 # Linear(200,100) + ReLU
        # Linear(100,20) with eval BatchNorm1d(20) folded in (f32 weights);
        # Dropout(0.2) is identity in eval mode.
        h = jnp.dot(h, w3_ref[...], preferred_element_type=f32) + b3
        h = jnp.maximum(h, 0.0)
        h = jnp.dot(h.astype(bf16), wmid_ref[0:P3, P2:P2 + P4],
                    preferred_element_type=f32) + b4
        h = jnp.maximum(h, 0.0)                 # Linear(20,100)  + ReLU
        h = jnp.dot(h.astype(bf16), wmid_ref[0:P4, P2 + P4:P2 + P4 + P5],
                    preferred_element_type=f32) + b5
        h = jnp.maximum(h, 0.0)                 # Linear(100,200) + ReLU
        y = jnp.dot(h.astype(bf16), w6_ref[...], preferred_element_type=f32) + b6
        y = jnp.where(y > 0.0, y, LEAKY_SLOPE * y)   # LeakyReLU(0.1)
        y = jnp.nan_to_num(y)                        # torch.nan_to_num on output
        # set_bounds: clamp to the hoisted per-feature [lo, hi] of the input.
        out_ref[...] = jnp.maximum(jnp.minimum(y, hi_v), lo_v)

    # VMEM budget: weights/vecs (assume double-buffered) + double-buffered x/out
    # tiles + f32 intermediates + headroom; capped below v7x's 64 MiB physical.
    weight_bytes = sum(int(a.size) * a.dtype.itemsize for a in (w1, wmid, w3, w6, vecs))
    io_bytes = 2 * tb * Dp * 4
    act_bytes = tb * (Dp + 2 * max(P1, P5)) * 4
    vmem_limit = 2 * (weight_bytes + io_bytes) + act_bytes + (4 << 20)
    vmem_limit = int(max(16 << 20, min(vmem_limit, 48 << 20)))

    y_flat = pl.pallas_call(
        kernel,
        out_shape=jax.ShapeDtypeStruct((Bp, Dp), jnp.float32),
        grid_spec=pltpu.PrefetchScalarGridSpec(
            num_scalar_prefetch=0,
            grid=grid,
            in_specs=[
                pl.BlockSpec((tb, Dp), lambda i: (i, 0)),       # x tile
                pl.BlockSpec((8, bcols), lambda i: (0, 0)),     # biases + lo/hi
                pl.BlockSpec(w1.shape, lambda i: (0, 0)),       # W1
                pl.BlockSpec(wmid.shape, lambda i: (0, 0)),     # W2/W4/W5 packed
                pl.BlockSpec(w3.shape, lambda i: (0, 0)),       # W3 (BN folded, f32)
                pl.BlockSpec(w6.shape, lambda i: (0, 0)),       # W6
            ],
            out_specs=pl.BlockSpec((tb, Dp), lambda i: (i, 0)),
        ),
        compiler_params=pltpu.CompilerParams(
            dimension_semantics=("parallel",),
            vmem_limit_bytes=vmem_limit,
        ),
    )(xf, vecs, w1, wmid, w3, w6)

    return y_flat[:B, :D].reshape(x.shape)


# ----------------------------------------------------------------------------
# Pure-JAX reference (f32, unfolded BN) for a numeric sanity check.
# ----------------------------------------------------------------------------
def reference_forward(x, ws, bs, bn):
    B = x.shape[0]
    D = math.prod(x.shape[1:])
    xf = jnp.nan_to_num(x.astype(jnp.float32)).reshape(B, D)

    def dense(h, w, b):
        return h @ w + b

    h = jax.nn.relu(dense(xf, ws[0], bs[0]))
    h = jax.nn.relu(dense(h, ws[1], bs[1]))
    h = dense(h, ws[2], bs[2])
    gamma, beta, rmean, rvar = bn
    h = (h - rmean) * jax.lax.rsqrt(rvar + BN_EPS) * gamma + beta
    h = jax.nn.relu(h)
    h = jax.nn.relu(dense(h, ws[3], bs[3]))
    h = jax.nn.relu(dense(h, ws[4], bs[4]))
    y = dense(h, ws[5], bs[5])
    y = jnp.where(y > 0.0, y, LEAKY_SLOPE * y)
    y = jnp.nan_to_num(y)
    lo = jnp.min(xf, axis=0, keepdims=True)
    hi = jnp.max(xf, axis=0, keepdims=True)
    return jnp.maximum(jnp.minimum(y, hi), lo).reshape(x.shape)


if __name__ == "__main__":
    key = jax.random.PRNGKey(0)
    kx, kp = jax.random.split(key)

    B, C, H, W = 2, 4, 16, 16                  # input_size = 1024
    x = jax.random.normal(kx, (B, C, H, W), jnp.float32)
    x = x.at[0, 0, 0, 0].set(jnp.nan)          # exercise nan_to_num

    input_size = C * H * W
    ws, bs, bn = init_params(kp, input_size)
    params = prepare_params(ws, bs, bn, input_size)

    y = organ_autoencoder(x, params)
    jax.block_until_ready(y)

    assert y.shape == x.shape and y.dtype == jnp.float32
    assert bool(jnp.all(jnp.isfinite(y)))

    y_ref = reference_forward(x, ws, bs, bn)
    max_err = float(jnp.max(jnp.abs(y - y_ref)))
    assert max_err < 0.1, f"max abs error vs f32 reference too large: {max_err}"

    print("KERNEL_OK")
</pallas_src>

<mosaic_0001>
module attributes {stable_mosaic.version = 11 : i64} {
  func.func @kernel(%arg0: i32, %arg1: memref<8x1024xf32, #tpu.memory_space<vmem>>, %arg2: memref<8x1024xf32, #tpu.memory_space<vmem>>, %arg3: memref<1024x256xbf16, #tpu.memory_space<vmem>>, %arg4: memref<256x512xbf16, #tpu.memory_space<vmem>>, %arg5: memref<128x128xf32, #tpu.memory_space<vmem>>, %arg6: memref<256x1024xbf16, #tpu.memory_space<vmem>>, %arg7: memref<8x1024xf32, #tpu.memory_space<vmem>>) attributes {dimension_semantics = [#tpu.dimension_semantics<parallel>], iteration_bounds = array<i64: 1>, scalar_prefetch = 0 : i64, scratch_operands = 0 : i64, tpu.core_type = #tpu.core_type<tc>, window_params = [{transform_indices = @transform_0, window_bounds = array<i64: 8, 1024>}, {pipeline_mode = #tpu.pipeline_mode<synchronous>, transform_indices = @transform_1, window_bounds = array<i64: 8, 1024>}, {pipeline_mode = #tpu.pipeline_mode<synchronous>, transform_indices = @transform_2, window_bounds = array<i64: 1024, 256>}, {pipeline_mode = #tpu.pipeline_mode<synchronous>, transform_indices = @transform_3, window_bounds = array<i64: 256, 512>}, {pipeline_mode = #tpu.pipeline_mode<synchronous>, transform_indices = @transform_4, window_bounds = array<i64: 128, 128>}, {pipeline_mode = #tpu.pipeline_mode<synchronous>, transform_indices = @transform_5, window_bounds = array<i64: 256, 1024>}, {transform_indices = @transform_6, window_bounds = array<i64: 8, 1024>}]} {
    %c0 = arith.constant 0 : index
    %c0_0 = arith.constant 0 : index
    %0 = vector.load %arg2[%c0, %c0_0] : memref<8x1024xf32, #tpu.memory_space<vmem>>, vector<1x256xf32>
    %c1 = arith.constant 1 : index
    %c0_1 = arith.constant 0 : index
    %1 = vector.load %arg2[%c1, %c0_1] : memref<8x1024xf32, #tpu.memory_space<vmem>>, vector<1x128xf32>
    %c2 = arith.constant 2 : index
    %c0_2 = arith.constant 0 : index
    %2 = vector.load %arg2[%c2, %c0_2] : memref<8x1024xf32, #tpu.memory_space<vmem>>, vector<1x128xf32>
    %c3 = arith.constant 3 : index
    %c0_3 = arith.constant 0 : index
    %3 = vector.load %arg2[%c3, %c0_3] : memref<8x1024xf32, #tpu.memory_space<vmem>>, vector<1x128xf32>
    %c4 = arith.constant 4 : index
    %c0_4 = arith.constant 0 : index
    %4 = vector.load %arg2[%c4, %c0_4] : memref<8x1024xf32, #tpu.memory_space<vmem>>, vector<1x256xf32>
    %c5 = arith.constant 5 : index
    %c0_5 = arith.constant 0 : index
    %5 = vector.load %arg2[%c5, %c0_5] : memref<8x1024xf32, #tpu.memory_space<vmem>>, vector<1x1024xf32>
    %c6 = arith.constant 6 : index
    %c0_6 = arith.constant 0 : index
    %6 = vector.load %arg2[%c6, %c0_6] : memref<8x1024xf32, #tpu.memory_space<vmem>>, vector<1x1024xf32>
    %c7 = arith.constant 7 : index
    %c0_7 = arith.constant 0 : index
    %7 = vector.load %arg2[%c7, %c0_7] : memref<8x1024xf32, #tpu.memory_space<vmem>>, vector<1x1024xf32>
    %c0_8 = arith.constant 0 : index
    %c0_9 = arith.constant 0 : index
    %8 = vector.load %arg1[%c0_8, %c0_9] : memref<8x1024xf32, #tpu.memory_space<vmem>>, vector<8x1024xf32>
    %9 = arith.truncf %8 : vector<8x1024xf32> to vector<8x1024xbf16>
    %c0_10 = arith.constant 0 : index
    %c0_11 = arith.constant 0 : index
    %10 = vector.load %arg3[%c0_10, %c0_11] : memref<1024x256xbf16, #tpu.memory_space<vmem>>, vector<1024x256xbf16>
    %cst = arith.constant dense<0.000000e+00> : vector<8x256xf32>
    %11 = tpu.matmul %9, %10, %cst {dimension_numbers = #tpu.dot_dimension_numbers<[1], [0], [0], [1], [0, 0, 1, 1], [], []>} : vector<8x1024xbf16>, vector<1024x256xbf16>, vector<8x256xf32> -> vector<8x256xf32>
    %12 = vector.broadcast %0 : vector<1x256xf32> to vector<8x256xf32>
    %13 = arith.addf %11, %12 : vector<8x256xf32>
    %cst_12 = arith.constant 0.000000e+00 : f32
    %14 = vector.broadcast %cst_12 : f32 to vector<8x256xf32>
    %15 = arith.maximumf %13, %14 : vector<8x256xf32>
    %16 = arith.truncf %15 : vector<8x256xf32> to vector<8x256xbf16>
    %c0_13 = arith.constant 0 : index
    %c0_14 = arith.constant 0 : index
    %17 = vector.load %arg4[%c0_13, %c0_14] : memref<256x512xbf16, #tpu.memory_space<vmem>>, vector<256x128xbf16>
    %cst_15 = arith.constant dense<0.000000e+00> : vector<8x128xf32>
    %18 = tpu.matmul %16, %17, %cst_15 {dimension_numbers = #tpu.dot_dimension_numbers<[1], [0], [0], [1], [0, 0, 1, 1], [], []>} : vector<8x256xbf16>, vector<256x128xbf16>, vector<8x128xf32> -> vector<8x128xf32>
    %19 = vector.broadcast %1 : vector<1x128xf32> to vector<8x128xf32>
    %20 = arith.addf %18, %19 : vector<8x128xf32>
    %cst_16 = arith.constant 0.000000e+00 : f32
    %21 = vector.broadcast %cst_16 : f32 to vector<8x128xf32>
    %22 = arith.maximumf %20, %21 : vector<8x128xf32>
    %c0_17 = arith.constant 0 : index
    %c0_18 = arith.constant 0 : index
    %23 = vector.load %arg5[%c0_17, %c0_18] : memref<128x128xf32, #tpu.memory_space<vmem>>, vector<128x128xf32>
    %cst_19 = arith.constant dense<0.000000e+00> : vector<8x128xf32>
    %24 = tpu.matmul %22, %23, %cst_19 {dimension_numbers = #tpu.dot_dimension_numbers<[1], [0], [0], [1], [0, 0, 1, 1], [], []>} : vector<8x128xf32>, vector<128x128xf32>, vector<8x128xf32> -> vector<8x128xf32>
    %25 = vector.broadcast %2 : vector<1x128xf32> to vector<8x128xf32>
    %26 = arith.addf %24, %25 : vector<8x128xf32>
    %cst_20 = arith.constant 0.000000e+00 : f32
    %27 = vector.broadcast %cst_20 : f32 to vector<8x128xf32>
    %28 = arith.maximumf %26, %27 : vector<8x128xf32>
    %29 = arith.truncf %28 : vector<8x128xf32> to vector<8x128xbf16>
    %c0_21 = arith.constant 0 : index
    %c128 = arith.constant 128 : index
    %30 = vector.load %arg4[%c0_21, %c128] : memref<256x512xbf16, #tpu.memory_space<vmem>>, vector<128x128xbf16>
    %cst_22 = arith.constant dense<0.000000e+00> : vector<8x128xf32>
    %31 = tpu.matmul %29, %30, %cst_22 {dimension_numbers = #tpu.dot_dimension_numbers<[1], [0], [0], [1], [0, 0, 1, 1], [], []>} : vector<8x128xbf16>, vector<128x128xbf16>, vector<8x128xf32> -> vector<8x128xf32>
    %32 = vector.broadcast %3 : vector<1x128xf32> to vector<8x128xf32>
    %33 = arith.addf %31, %32 : vector<8x128xf32>
    %cst_23 = arith.constant 0.000000e+00 : f32
    %34 = vector.broadcast %cst_23 : f32 to vector<8x128xf32>
    %35 = arith.maximumf %33, %34 : vector<8x128xf32>
    %36 = arith.truncf %35 : vector<8x128xf32> to vector<8x128xbf16>
    %c0_24 = arith.constant 0 : index
    %c256 = arith.constant 256 : index
    %37 = vector.load %arg4[%c0_24, %c256] : memref<256x512xbf16, #tpu.memory_space<vmem>>, vector<128x256xbf16>
    %cst_25 = arith.constant dense<0.000000e+00> : vector<8x256xf32>
    %38 = tpu.matmul %36, %37, %cst_25 {dimension_numbers = #tpu.dot_dimension_numbers<[1], [0], [0], [1], [0, 0, 1, 1], [], []>} : vector<8x128xbf16>, vector<128x256xbf16>, vector<8x256xf32> -> vector<8x256xf32>
    %39 = vector.broadcast %4 : vector<1x256xf32> to vector<8x256xf32>
    %40 = arith.addf %38, %39 : vector<8x256xf32>
    %cst_26 = arith.constant 0.000000e+00 : f32
    %41 = vector.broadcast %cst_26 : f32 to vector<8x256xf32>
    %42 = arith.maximumf %40, %41 : vector<8x256xf32>
    %43 = arith.truncf %42 : vector<8x256xf32> to vector<8x256xbf16>
    %c0_27 = arith.constant 0 : index
    %c0_28 = arith.constant 0 : index
    %44 = vector.load %arg6[%c0_27, %c0_28] : memref<256x1024xbf16, #tpu.memory_space<vmem>>, vector<256x1024xbf16>
    %cst_29 = arith.constant dense<0.000000e+00> : vector<8x1024xf32>
    %45 = tpu.matmul %43, %44, %cst_29 {dimension_numbers = #tpu.dot_dimension_numbers<[1], [0], [0], [1], [0, 0, 1, 1], [], []>} : vector<8x256xbf16>, vector<256x1024xbf16>, vector<8x1024xf32> -> vector<8x1024xf32>
    %46 = vector.broadcast %5 : vector<1x1024xf32> to vector<8x1024xf32>
    %47 = arith.addf %45, %46 : vector<8x1024xf32>
    %cst_30 = arith.constant 0.000000e+00 : f32
    %48 = vector.broadcast %cst_30 : f32 to vector<8x1024xf32>
    %49 = arith.cmpf ogt, %47, %48 : vector<8x1024xf32>
    %cst_31 = arith.constant 1.000000e-01 : f32
    %50 = vector.broadcast %cst_31 : f32 to vector<8x1024xf32>
    %51 = arith.mulf %50, %47 : vector<8x1024xf32>
    %52 = arith.select %49, %47, %51 : vector<8x1024xi1>, vector<8x1024xf32>
    %53 = arith.cmpf one, %52, %52 : vector<8x1024xf32>
    %cst_32 = arith.constant 0.000000e+00 : f32
    %54 = vector.broadcast %cst_32 : f32 to vector<8x1024xf32>
    %55 = arith.select %53, %54, %52 : vector<8x1024xi1>, vector<8x1024xf32>
    %cst_33 = arith.constant 0x7F800000 : f32
    %56 = vector.broadcast %cst_33 : f32 to vector<8x1024xf32>
    %57 = arith.cmpf oeq, %55, %56 : vector<8x1024xf32>
    %cst_34 = arith.constant 3.40282347E+38 : f32
    %58 = vector.broadcast %cst_34 : f32 to vector<8x1024xf32>
    %59 = arith.select %57, %58, %55 : vector<8x1024xi1>, vector<8x1024xf32>
    %cst_35 = arith.constant 0xFF800000 : f32
    %60 = vector.broadcast %cst_35 : f32 to vector<8x1024xf32>
    %61 = arith.cmpf oeq, %59, %60 : vector<8x1024xf32>
    %cst_36 = arith.constant -3.40282347E+38 : f32
    %62 = vector.broadcast %cst_36 : f32 to vector<8x1024xf32>
    %63 = arith.select %61, %62, %59 : vector<8x1024xi1>, vector<8x1024xf32>
    %64 = vector.broadcast %7 : vector<1x1024xf32> to vector<8x1024xf32>
    %65 = arith.minimumf %63, %64 : vector<8x1024xf32>
    %66 = vector.broadcast %6 : vector<1x1024xf32> to vector<8x1024xf32>
    %67 = arith.maximumf %65, %66 : vector<8x1024xf32>
    %c0_37 = arith.constant 0 : index
    %c0_38 = arith.constant 0 : index
    %68 = vector.load %arg7[%c0_37, %c0_38] : memref<8x1024xf32, #tpu.memory_space<vmem>>, vector<8x1024xf32>
    tpu.vector_store %arg7[%c0_37, %c0_38], %67 {strides = array<i32>} : memref<8x1024xf32, #tpu.memory_space<vmem>>, vector<8x1024xf32>,
    return
  }
  func.func @transform_0(%arg0: i32) -> (i32, i32) {
    %c0_i32 = arith.constant 0 : i32
    %c0_i32_0 = arith.constant 0 : i32
    return %arg0, %c0_i32 : i32, i32
  }
  func.func @transform_1(%arg0: i32) -> (i32, i32) {
    %c0_i32 = arith.constant 0 : i32
    %c0_i32_0 = arith.constant 0 : i32
    %c0_i32_1 = arith.constant 0 : i32
    return %c0_i32, %c0_i32_0 : i32, i32
  }
  func.func @transform_2(%arg0: i32) -> (i32, i32) {
    %c0_i32 = arith.constant 0 : i32
    %c0_i32_0 = arith.constant 0 : i32
    %c0_i32_1 = arith.constant 0 : i32
    return %c0_i32, %c0_i32_0 : i32, i32
  }
  func.func @transform_3(%arg0: i32) -> (i32, i32) {
    %c0_i32 = arith.constant 0 : i32
    %c0_i32_0 = arith.constant 0 : i32
    %c0_i32_1 = arith.constant 0 : i32
    return %c0_i32, %c0_i32_0 : i32, i32
  }
  func.func @transform_4(%arg0: i32) -> (i32, i32) {
    %c0_i32 = arith.constant 0 : i32
    %c0_i32_0 = arith.constant 0 : i32
    %c0_i32_1 = arith.constant 0 : i32
    return %c0_i32, %c0_i32_0 : i32, i32
  }
  func.func @transform_5(%arg0: i32) -> (i32, i32) {
    %c0_i32 = arith.constant 0 : i32
    %c0_i32_0 = arith.constant 0 : i32
    %c0_i32_1 = arith.constant 0 : i32
    return %c0_i32, %c0_i32_0 : i32, i32
  }
  func.func @transform_6(%arg0: i32) -> (i32, i32) {
    %c0_i32 = arith.constant 0 : i32
    %c0_i32_0 = arith.constant 0 : i32
    return %arg0, %c0_i32 : i32, i32
  }
}

</mosaic_0001>

<llo_original>
// kernel: tpu_custom_call.1
$region0: #{tpu_custom_call.1}
  #allocation0 [shape = 'u32[]', space=smem, size = 0x4, offset = 0x4, fixed_abs, tag = 'smem constant byte address 0x4 - core index']
  #allocation1 [shape = 'u32[144,128]{1,0:T(1,128)}', space=vmem, size = 0x12000, scoped, tag = 'internal scratch']
  %s0 = inlined_call_operand.hbm [shape: f32[8,1024], index: 0, kind: input, shape index: {}]
  %s1 = inlined_call_operand.hbm [shape: f32[8,1024], index: 1, kind: input, shape index: {}]
  %s2 = inlined_call_operand.hbm [shape: bf16[1024,256], index: 2, kind: input, shape index: {}]
  %s3 = inlined_call_operand.hbm [shape: bf16[256,512], index: 3, kind: input, shape index: {}]
  %s4 = inlined_call_operand.hbm [shape: f32[128,128], index: 4, kind: input, shape index: {}]
  %s5 = inlined_call_operand.hbm [shape: bf16[256,1024], index: 5, kind: input, shape index: {}]
  %s6 = inlined_call_operand.hbm [shape: f32[8,1024], index: 6, kind: output, shape index: {}]
  %s7 = sld [smem:[#allocation0]]
  $region58: #{tpu_custom_call.1} parent=0
    _
  %s9 = ssub.s32 1, %s7
  %s10 = scalar_select 0, %s9, %s7
  $region1: #{tpu_custom_call.1} parent=0
    #allocation2 [shape = 'u8[32768]{0}', space=vmem, size = 0x8000, scoped, tag = 'input window, operand 0, single buffered']
    #allocation3 [shape = 's32[1]{0}', space=sflag, size = 0x4, scoped, tag = 'scoped memory for tpu_custom_call.1']
    #allocation4 [shape = 's32[1]{0}', space=sflag, size = 0x4, scoped, tag = 'scoped memory for tpu_custom_call.1']
    #allocation5 [shape = 'u8[32768]{0}', space=vmem, size = 0x8000, scoped, tag = 'input window, operand 1, single buffered']
    #allocation6 [shape = 's32[1]{0}', space=sflag, size = 0x4, scoped, tag = 'scoped memory for tpu_custom_call.1']
    #allocation7 [shape = 'u8[524288]{0}', space=vmem, size = 0x80000, scoped, tag = 'input window, operand 2, single buffered']
    #allocation8 [shape = 'u8[262144]{0}', space=vmem, size = 0x40000, scoped, tag = 'input window, operand 3, single buffered']
    #allocation9 [shape = 's32[1]{0}', space=sflag, size = 0x4, scoped, tag = 'scoped memory for tpu_custom_call.1']
    #allocation10 [shape = 'u8[65536]{0}', space=vmem, size = 0x10000, scoped, tag = 'input window, operand 4, single buffered']
    #allocation11 [shape = 'u8[524288]{0}', space=vmem, size = 0x80000, scoped, tag = 'input window, operand 5, single buffered']
    #allocation12 [shape = 's32[1]{0}', space=sflag, size = 0x4, scoped, tag = 'scoped memory for tpu_custom_call.1']
    #allocation13 [shape = 'u8[32768]{0}', space=vmem, size = 0x8000, scoped, tag = 'output window, operand 0, single buffered']
    %11 = vsyncpa [#allocation3], 0
    %12 = vsyncpa [#allocation6], 0
    %13 = vsyncpa [#allocation9], 0
    %14 = vsyncpa [#allocation12], 0
    %15 = vsyncpa [#allocation4], 0
    // Predicated region
    $region2: #{tpu_custom_call.1} parent=1 // pred_check
      _
    $region3: #{tpu_custom_call.1} parent=1 // pred_check_branch
      %17 = sbr.rel (0) target = $region5
    $region4: #{tpu_custom_call.1} parent=1 // pred_region
      %s19 = ssub.s32 1024, 1024
      %20 = vsyncadd [#allocation3], %s19
      %s22 = sshll.u32 [#allocation2], 4
      %s23 = int_to_ptr.vmem [resolvable:$true] %s22
      %25 = dma.hbm_to_vmem [thread:$0]  %s0, 1024, %s23, [#allocation3]
    $region5: #{tpu_custom_call.1} parent=1 // pred_fallthru
      _
    // Predicated region
    $region6: #{tpu_custom_call.1} parent=1 // pred_check
      _
    $region7: #{tpu_custom_call.1} parent=1 // pred_check_branch
      %27 = sbr.rel (0) target = $region9
    $region8: #{tpu_custom_call.1} parent=1 // pred_region
      %s29 = ssub.s32 1024, 1024
      %30 = vsyncadd [#allocation6], %s29
      %s32 = sshll.u32 [#allocation5], 4
      %s33 = int_to_ptr.vmem [resolvable:$true] %s32
      %35 = dma.hbm_to_vmem [thread:$0]  %s1, 1024, %s33, [#allocation6]
    $region9: #{tpu_custom_call.1} parent=1 // pred_fallthru
      _
    // Predicated region
    $region10: #{tpu_custom_call.1} parent=1 // pred_check
      _
    $region11: #{tpu_custom_call.1} parent=1 // pred_check_branch
      %37 = sbr.rel (0) target = $region13
    $region12: #{tpu_custom_call.1} parent=1 // pred_region
      %s39 = ssub.s32 16384, 16384
      %40 = vsyncadd [#allocation6], %s39
      %s41 = sshll.u32 [#allocation7], 4
      %s42 = int_to_ptr.vmem [resolvable:$true] %s41
      %47 = dma.hbm_to_vmem [thread:$0]  %s2, 16384, %s42, [#allocation6], 128, 128, 8
    $region13: #{tpu_custom_call.1} parent=1 // pred_fallthru
      _
    // Predicated region
    $region14: #{tpu_custom_call.1} parent=1 // pred_check
      _
    $region15: #{tpu_custom_call.1} parent=1 // pred_check_branch
      %49 = sbr.rel (0) target = $region17
    $region16: #{tpu_custom_call.1} parent=1 // pred_region
      %s51 = ssub.s32 8192, 8192
      %52 = vsyncadd [#allocation9], %s51
      %s53 = sshll.u32 [#allocation8], 4
      %s54 = int_to_ptr.vmem [resolvable:$true] %s53
      %59 = dma.hbm_to_vmem [thread:$0]  %s3, 8192, %s54, [#allocation9], 256, 256, 16
    $region17: #{tpu_custom_call.1} parent=1 // pred_fallthru
      _
    // Predicated region
    $region18: #{tpu_custom_call.1} parent=1 // pred_check
      _
    $region19: #{tpu_custom_call.1} parent=1 // pred_check_branch
      %61 = sbr.rel (0) target = $region21
    $region20: #{tpu_custom_call.1} parent=1 // pred_region
      %s63 = ssub.s32 2048, 2048
      %64 = vsyncadd [#allocation9], %s63
      %s65 = sshll.u32 [#allocation10], 4
      %s66 = int_to_ptr.vmem [resolvable:$true] %s65
      %71 = dma.hbm_to_vmem [thread:$0]  %s4, 2048, %s66, [#allocation9], 128, 128, 8
    $region21: #{tpu_custom_call.1} parent=1 // pred_fallthru
      _
    // Predicated region
    $region22: #{tpu_custom_call.1} parent=1 // pred_check
      _
    $region23: #{tpu_custom_call.1} parent=1 // pred_check_branch
      %73 = sbr.rel (0) target = $region25
    $region24: #{tpu_custom_call.1} parent=1 // pred_region
      %s75 = ssub.s32 16384, 16384
      %76 = vsyncadd [#allocation12], %s75
      %s77 = sshll.u32 [#allocation11], 4
      %s78 = int_to_ptr.vmem [resolvable:$true] %s77
      %83 = dma.hbm_to_vmem [thread:$0]  %s5, 16384, %s78, [#allocation12], 512, 512, 32
    $region25: #{tpu_custom_call.1} parent=1 // pred_fallthru
      _
    // Predicated region
    $region26: #{tpu_custom_call.1} parent=1 // pred_check
      _
    $region27: #{tpu_custom_call.1} parent=1 // pred_check_branch
      %85 = sbr.rel (0) target = $region29
    $region28: #{tpu_custom_call.1} parent=1 // pred_region
      %86 = dma.done [#allocation3], 1024
    $region29: #{tpu_custom_call.1} parent=1 // pred_fallthru
      _
    // Predicated region
    $region30: #{tpu_custom_call.1} parent=1 // pred_check
      _
    $region31: #{tpu_custom_call.1} parent=1 // pred_check_branch
      %88 = sbr.rel (0) target = $region33
    $region32: #{tpu_custom_call.1} parent=1 // pred_region
      %89 = dma.done [#allocation6], 1024
    $region33: #{tpu_custom_call.1} parent=1 // pred_fallthru
      _
    // Predicated region
    $region34: #{tpu_custom_call.1} parent=1 // pred_check
      _
    $region35: #{tpu_custom_call.1} parent=1 // pred_check_branch
      %91 = sbr.rel (0) target = $region37
    $region36: #{tpu_custom_call.1} parent=1 // pred_region
      %92 = dma.done [#allocation6], 16384
    $region37: #{tpu_custom_call.1} parent=1 // pred_fallthru
      _
    // Predicated region
    $region38: #{tpu_custom_call.1} parent=1 // pred_check
      _
    $region39: #{tpu_custom_call.1} parent=1 // pred_check_branch
      %94 = sbr.rel (0) target = $region41
    $region40: #{tpu_custom_call.1} parent=1 // pred_region
      %95 = dma.done [#allocation9], 8192
    $region41: #{tpu_custom_call.1} parent=1 // pred_fallthru
      _
    // Predicated region
    $region42: #{tpu_custom_call.1} parent=1 // pred_check
      _
    $region43: #{tpu_custom_call.1} parent=1 // pred_check_branch
      %97 = sbr.rel (0) target = $region45
    $region44: #{tpu_custom_call.1} parent=1 // pred_region
      %98 = dma.done [#allocation9], 2048
    $region45: #{tpu_custom_call.1} parent=1 // pred_fallthru
      _
    // Predicated region
    $region46: #{tpu_custom_call.1} parent=1 // pred_check
      _
    $region47: #{tpu_custom_call.1} parent=1 // pred_check_branch
      %100 = sbr.rel (0) target = $region49
    $region48: #{tpu_custom_call.1} parent=1 // pred_region
      %101 = dma.done [#allocation12], 16384
    $region49: #{tpu_custom_call.1} parent=1 // pred_fallthru
      _
    %v103 = vld [vmem:[#allocation5] ss:$8 sm:$0x3]
    %v104 = vld [vmem:[#allocation5 + $0x1] ss:$0 sm:$0xff]
    %v105 = vld [vmem:[#allocation5 + $0x2] ss:$0 sm:$0xff]
    %v106 = vld [vmem:[#allocation5 + $0x3] ss:$0 sm:$0xff]
    %s107 = scalar_lea.vmem [#allocation5], 4
    %v108 = vld [vmem:[%s107] ss:$8 sm:$0x3]
    %s109 = scalar_lea.vmem [#allocation5], 5
    %v110 = vld [vmem:[%s109] ss:$8 sm:$0xf]
    %v111 = vld [vmem:[%s109] ss:$8 sm:$0xf0]
    %v112 = vor.u32 %v110, %v111
    %s113 = scalar_lea.vmem [#allocation5], 6
    %v114 = vld [vmem:[%s113] ss:$8 sm:$0xf]
    %v115 = vld [vmem:[%s113] ss:$8 sm:$0xf0]
    %v116 = vor.u32 %v114, %v115
    %s117 = scalar_lea.vmem [#allocation5], 7
    %v118 = vld [vmem:[%s117] ss:$8 sm:$0xf]
    %v119 = vld [vmem:[%s117] ss:$8 sm:$0xf0]
    %v120 = vor.u32 %v118, %v119
    %v121 = vld [vmem:[#allocation2] sm:$0xff]
    %v122 = vld [vmem:[#allocation2 + $0x8] sm:$0xff]
    %v123 = vld [vmem:[#allocation2 + $0x10] sm:$0xff]
    %v124 = vld [vmem:[#allocation2 + $0x18] sm:$0xff]
    %v125 = vld [vmem:[#allocation2 + $0x20] sm:$0xff]
    %v126 = vld [vmem:[#allocation2 + $0x28] sm:$0xff]
    %v127 = vld [vmem:[#allocation2 + $0x30] sm:$0xff]
    %v128 = vld [vmem:[#allocation2 + $0x38] sm:$0xff]
    %v129 = vpack.c.bf16 %v121, %v121
    %v130 = vpack.c.bf16 %v122, %v122
    %v131 = vpack.c.bf16 %v123, %v123
    %v132 = vpack.c.bf16 %v124, %v124
    %v133 = vpack.c.bf16 %v125, %v125
    %v134 = vpack.c.bf16 %v126, %v126
    %v135 = vpack.c.bf16 %v127, %v127
    %v136 = vpack.c.bf16 %v128, %v128
    %v137 = vld [vmem:[#allocation7] sm:$0xff]
    %v138 = vld [vmem:[#allocation7 + $0x8] sm:$0xff]
    %v139 = vld [vmem:[#allocation7 + $0x10] sm:$0xff]
    %v140 = vld [vmem:[#allocation7 + $0x18] sm:$0xff]
    %v141 = vld [vmem:[#allocation7 + $0x20] sm:$0xff]
    %v142 = vld [vmem:[#allocation7 + $0x28] sm:$0xff]
    %v143 = vld [vmem:[#allocation7 + $0x30] sm:$0xff]
    %v144 = vld [vmem:[#allocation7 + $0x38] sm:$0xff]
    %v145 = vld [vmem:[#allocation7 + $0x40] sm:$0xff]
    %v146 = vld [vmem:[#allocation7 + $0x48] sm:$0xff]
    %v147 = vld [vmem:[#allocation7 + $0x50] sm:$0xff]
    %v148 = vld [vmem:[#allocation7 + $0x58] sm:$0xff]
    %v149 = vld [vmem:[#allocation7 + $0x60] sm:$0xff]
    %v150 = vld [vmem:[#allocation7 + $0x68] sm:$0xff]
    %v151 = vld [vmem:[#allocation7 + $0x70] sm:$0xff]
    %v152 = vld [vmem:[#allocation7 + $0x78] sm:$0xff]
    %v153 = vld [vmem:[#allocation7 + $0x80] sm:$0xff]
    %v154 = vld [vmem:[#allocation7 + $0x88] sm:$0xff]
    %v155 = vld [vmem:[#allocation7 + $0x90] sm:$0xff]
    %v156 = vld [vmem:[#allocation7 + $0x98] sm:$0xff]
    %v157 = vld [vmem:[#allocation7 + $0xa0] sm:$0xff]
    %v158 = vld [vmem:[#allocation7 + $0xa8] sm:$0xff]
    %v159 = vld [vmem:[#allocation7 + $0xb0] sm:$0xff]
    %v160 = vld [vmem:[#allocation7 + $0xb8] sm:$0xff]
    %v161 = vld [vmem:[#allocation7 + $0xc0] sm:$0xff]
    %v162 = vld [vmem:[#allocation7 + $0xc8] sm:$0xff]
    %v163 = vld [vmem:[#allocation7 + $0xd0] sm:$0xff]
    %v164 = vld [vmem:[#allocation7 + $0xd8] sm:$0xff]
    %v165 = vld [vmem:[#allocation7 + $0xe0] sm:$0xff]
    %v166 = vld [vmem:[#allocation7 + $0xe8] sm:$0xff]
    %v167 = vld [vmem:[#allocation7 + $0xf0] sm:$0xff]
    %v168 = vld [vmem:[#allocation7 + $0xf8] sm:$0xff]
    %v169 = vld [vmem:[#allocation7 + $0x100] sm:$0xff]
    %v170 = vld [vmem:[#allocation7 + $0x108] sm:$0xff]
    %v171 = vld [vmem:[#allocation7 + $0x110] sm:$0xff]
    %v172 = vld [vmem:[#allocation7 + $0x118] sm:$0xff]
    %v173 = vld [vmem:[#allocation7 + $0x120] sm:$0xff]
    %v174 = vld [vmem:[#allocation7 + $0x128] sm:$0xff]
    %v175 = vld [vmem:[#allocation7 + $0x130] sm:$0xff]
    %v176 = vld [vmem:[#allocation7 + $0x138] sm:$0xff]
    %v177 = vld [vmem:[#allocation7 + $0x140] sm:$0xff]
    %v178 = vld [vmem:[#allocation7 + $0x148] sm:$0xff]
    %v179 = vld [vmem:[#allocation7 + $0x150] sm:$0xff]
    %v180 = vld [vmem:[#allocation7 + $0x158] sm:$0xff]
    %v181 = vld [vmem:[#allocation7 + $0x160] sm:$0xff]
    %v182 = vld [vmem:[#allocation7 + $0x168] sm:$0xff]
    %v183 = vld [vmem:[#allocation7 + $0x170] sm:$0xff]
    %v184 = vld [vmem:[#allocation7 + $0x178] sm:$0xff]
    %v185 = vld [vmem:[#allocation7 + $0x180] sm:$0xff]
    %v186 = vld [vmem:[#allocation7 + $0x188] sm:$0xff]
    %v187 = vld [vmem:[#allocation7 + $0x190] sm:$0xff]
    %v188 = vld [vmem:[#allocation7 + $0x198] sm:$0xff]
    %v189 = vld [vmem:[#allocation7 + $0x1a0] sm:$0xff]
    %v190 = vld [vmem:[#allocation7 + $0x1a8] sm:$0xff]
    %v191 = vld [vmem:[#allocation7 + $0x1b0] sm:$0xff]
    %v192 = vld [vmem:[#allocation7 + $0x1b8] sm:$0xff]
    %v193 = vld [vmem:[#allocation7 + $0x1c0] sm:$0xff]
    %v194 = vld [vmem:[#allocation7 + $0x1c8] sm:$0xff]
    %v195 = vld [vmem:[#allocation7 + $0x1d0] sm:$0xff]
    %v196 = vld [vmem:[#allocation7 + $0x1d8] sm:$0xff]
    %v197 = vld [vmem:[#allocation7 + $0x1e0] sm:$0xff]
    %v198 = vld [vmem:[#allocation7 + $0x1e8] sm:$0xff]
    %v199 = vld [vmem:[#allocation7 + $0x1f0] sm:$0xff]
    %v200 = vld [vmem:[#allocation7 + $0x1f8] sm:$0xff]
    %v201 = vld [vmem:[#allocation7 + $0x200] sm:$0xff]
    %v202 = vld [vmem:[#allocation7 + $0x208] sm:$0xff]
    %v203 = vld [vmem:[#allocation7 + $0x210] sm:$0xff]
    %v204 = vld [vmem:[#allocation7 + $0x218] sm:$0xff]
    %v205 = vld [vmem:[#allocation7 + $0x220] sm:$0xff]
    %v206 = vld [vmem:[#allocation7 + $0x228] sm:$0xff]
    %v207 = vld [vmem:[#allocation7 + $0x230] sm:$0xff]
    %v208 = vld [vmem:[#allocation7 + $0x238] sm:$0xff]
    %v209 = vld [vmem:[#allocation7 + $0x240] sm:$0xff]
    %v210 = vld [vmem:[#allocation7 + $0x248] sm:$0xff]
    %v211 = vld [vmem:[#allocation7 + $0x250] sm:$0xff]
    %v212 = vld [vmem:[#allocation7 + $0x258] sm:$0xff]
    %v213 = vld [vmem:[#allocation7 + $0x260] sm:$0xff]
    %v214 = vld [vmem:[#allocation7 + $0x268] sm:$0xff]
    %v215 = vld [vmem:[#allocation7 + $0x270] sm:$0xff]
    %v216 = vld [vmem:[#allocation7 + $0x278] sm:$0xff]
    %v217 = vld [vmem:[#allocation7 + $0x280] sm:$0xff]
    %v218 = vld [vmem:[#allocation7 + $0x288] sm:$0xff]
    %v219 = vld [vmem:[#allocation7 + $0x290] sm:$0xff]
    %v220 = vld [vmem:[#allocation7 + $0x298] sm:$0xff]
    %v221 = vld [vmem:[#allocation7 + $0x2a0] sm:$0xff]
    %v222 = vld [vmem:[#allocation7 + $0x2a8] sm:$0xff]
    %v223 = vld [vmem:[#allocation7 + $0x2b0] sm:$0xff]
    %v224 = vld [vmem:[#allocation7 + $0x2b8] sm:$0xff]
    %v225 = vld [vmem:[#allocation7 + $0x2c0] sm:$0xff]
    %v226 = vld [vmem:[#allocation7 + $0x2c8] sm:$0xff]
    %v227 = vld [vmem:[#allocation7 + $0x2d0] sm:$0xff]
    %v228 = vld [vmem:[#allocation7 + $0x2d8] sm:$0xff]
    %v229 = vld [vmem:[#allocation7 + $0x2e0] sm:$0xff]
    %v230 = vld [vmem:[#allocation7 + $0x2e8] sm:$0xff]
    %v231 = vld [vmem:[#allocation7 + $0x2f0] sm:$0xff]
    %v232 = vld [vmem:[#allocation7 + $0x2f8] sm:$0xff]
    %v233 = vld [vmem:[#allocation7 + $0x300] sm:$0xff]
    %v234 = vld [vmem:[#allocation7 + $0x308] sm:$0xff]
    %v235 = vld [vmem:[#allocation7 + $0x310] sm:$0xff]
    %v236 = vld [vmem:[#allocation7 + $0x318] sm:$0xff]
    %v237 = vld [vmem:[#allocation7 + $0x320] sm:$0xff]
    %v238 = vld [vmem:[#allocation7 + $0x328] sm:$0xff]
    %v239 = vld [vmem:[#allocation7 + $0x330] sm:$0xff]
    %v240 = vld [vmem:[#allocation7 + $0x338] sm:$0xff]
    %v241 = vld [vmem:[#allocation7 + $0x340] sm:$0xff]
    %v242 = vld [vmem:[#allocation7 + $0x348] sm:$0xff]
    %v243 = vld [vmem:[#allocation7 + $0x350] sm:$0xff]
    %v244 = vld [vmem:[#allocation7 + $0x358] sm:$0xff]
    %v245 = vld [vmem:[#allocation7 + $0x360] sm:$0xff]
    %v246 = vld [vmem:[#allocation7 + $0x368] sm:$0xff]
    %v247 = vld [vmem:[#allocation7 + $0x370] sm:$0xff]
    %v248 = vld [vmem:[#allocation7 + $0x378] sm:$0xff]
    %v249 = vld [vmem:[#allocation7 + $0x380] sm:$0xff]
    %v250 = vld [vmem:[#allocation7 + $0x388] sm:$0xff]
    %v251 = vld [vmem:[#allocation7 + $0x390] sm:$0xff]
    %v252 = vld [vmem:[#allocation7 + $0x398] sm:$0xff]
    %v253 = vld [vmem:[#allocation7 + $0x3a0] sm:$0xff]
    %v254 = vld [vmem:[#allocation7 + $0x3a8] sm:$0xff]
    %v255 = vld [vmem:[#allocation7 + $0x3b0] sm:$0xff]
    %v256 = vld [vmem:[#allocation7 + $0x3b8] sm:$0xff]
    %v257 = vld [vmem:[#allocation7 + $0x3c0] sm:$0xff]
    %v258 = vld [vmem:[#allocation7 + $0x3c8] sm:$0xff]
    %v259 = vld [vmem:[#allocation7 + $0x3d0] sm:$0xff]
    %v260 = vld [vmem:[#allocation7 + $0x3d8] sm:$0xff]
    %v261 = vld [vmem:[#allocation7 + $0x3e0] sm:$0xff]
    %v262 = vld [vmem:[#allocation7 + $0x3e8] sm:$0xff]
    %v263 = vld [vmem:[#allocation7 + $0x3f0] sm:$0xff]
    %v264 = vld [vmem:[#allocation7 + $0x3f8] sm:$0xff]
    %v266 = vlaneseq
    %v267 = vshrl.u32 %v266, 7
    %v268 = vsub.s32 0, %v267
    %v269 = vrot.slane %v103, %v268
    %v270 = vlaneseq
    %v271 = vshrl.u32 %v270, 7
    %v272 = vsub.s32 1, %v271
    %v273 = vrot.slane %v103, %v272
    %v404 = vunpack.c.l.b16 %v137
    %v405 = vunpack.c.h.b16 %v137
    %v406 = vunpack.c.l.b16 %v138
    %v407 = vunpack.c.h.b16 %v138
    %v408 = vunpack.c.l.b16 %v139
    %v409 = vunpack.c.h.b16 %v139
    %v410 = vunpack.c.l.b16 %v140
    %v411 = vunpack.c.h.b16 %v140
    %v412 = vunpack.c.l.b16 %v141
    %v413 = vunpack.c.h.b16 %v141
    %v414 = vunpack.c.l.b16 %v142
    %v415 = vunpack.c.h.b16 %v142
    %v416 = vunpack.c.l.b16 %v143
    %v417 = vunpack.c.h.b16 %v143
    %v418 = vunpack.c.l.b16 %v144
    %v419 = vunpack.c.h.b16 %v144
    %v420 = vunpack.c.l.b16 %v145
    %v421 = vunpack.c.h.b16 %v145
    %v422 = vunpack.c.l.b16 %v146
    %v423 = vunpack.c.h.b16 %v146
    %v424 = vunpack.c.l.b16 %v147
    %v425 = vunpack.c.h.b16 %v147
    %v426 = vunpack.c.l.b16 %v148
    %v427 = vunpack.c.h.b16 %v148
    %v428 = vunpack.c.l.b16 %v149
    %v429 = vunpack.c.h.b16 %v149
    %v430 = vunpack.c.l.b16 %v150
    %v431 = vunpack.c.h.b16 %v150
    %v432 = vunpack.c.l.b16 %v151
    %v433 = vunpack.c.h.b16 %v151
    %v434 = vunpack.c.l.b16 %v152
    %v435 = vunpack.c.h.b16 %v152
    %v436 = vunpack.c.l.b16 %v153
    %v437 = vunpack.c.h.b16 %v153
    %v438 = vunpack.c.l.b16 %v154
    %v439 = vunpack.c.h.b16 %v154
    %v440 = vunpack.c.l.b16 %v155
    %v441 = vunpack.c.h.b16 %v155
    %v442 = vunpack.c.l.b16 %v156
    %v443 = vunpack.c.h.b16 %v156
    %v444 = vunpack.c.l.b16 %v157
    %v445 = vunpack.c.h.b16 %v157
    %v446 = vunpack.c.l.b16 %v158
    %v447 = vunpack.c.h.b16 %v158
    %v448 = vunpack.c.l.b16 %v159
    %v449 = vunpack.c.h.b16 %v159
    %v450 = vunpack.c.l.b16 %v160
    %v451 = vunpack.c.h.b16 %v160
    %v452 = vunpack.c.l.b16 %v161
    %v453 = vunpack.c.h.b16 %v161
    %v454 = vunpack.c.l.b16 %v162
    %v455 = vunpack.c.h.b16 %v162
    %v456 = vunpack.c.l.b16 %v163
    %v457 = vunpack.c.h.b16 %v163
    %v458 = vunpack.c.l.b16 %v164
    %v459 = vunpack.c.h.b16 %v164
    %v460 = vunpack.c.l.b16 %v165
    %v461 = vunpack.c.h.b16 %v165
    %v462 = vunpack.c.l.b16 %v166
    %v463 = vunpack.c.h.b16 %v166
    %v464 = vunpack.c.l.b16 %v167
    %v465 = vunpack.c.h.b16 %v167
    %v466 = vunpack.c.l.b16 %v168
    %v467 = vunpack.c.h.b16 %v168
    %v468 = vunpack.c.l.b16 %v169
    %v469 = vunpack.c.h.b16 %v169
    %v470 = vunpack.c.l.b16 %v170
    %v471 = vunpack.c.h.b16 %v170
    %v472 = vunpack.c.l.b16 %v171
    %v473 = vunpack.c.h.b16 %v171
    %v474 = vunpack.c.l.b16 %v172
    %v475 = vunpack.c.h.b16 %v172
    %v476 = vunpack.c.l.b16 %v173
    %v477 = vunpack.c.h.b16 %v173
    %v478 = vunpack.c.l.b16 %v174
    %v479 = vunpack.c.h.b16 %v174
    %v480 = vunpack.c.l.b16 %v175
    %v481 = vunpack.c.h.b16 %v175
    %v482 = vunpack.c.l.b16 %v176
    %v483 = vunpack.c.h.b16 %v176
    %v484 = vunpack.c.l.b16 %v177
    %v485 = vunpack.c.h.b16 %v177
    %v486 = vunpack.c.l.b16 %v178
    %v487 = vunpack.c.h.b16 %v178
    %v488 = vunpack.c.l.b16 %v179
    %v489 = vunpack.c.h.b16 %v179
    %v490 = vunpack.c.l.b16 %v180
    %v491 = vunpack.c.h.b16 %v180
    %v492 = vunpack.c.l.b16 %v181
    %v493 = vunpack.c.h.b16 %v181
    %v494 = vunpack.c.l.b16 %v182
    %v495 = vunpack.c.h.b16 %v182
    %v496 = vunpack.c.l.b16 %v183
    %v497 = vunpack.c.h.b16 %v183
    %v498 = vunpack.c.l.b16 %v184
    %v499 = vunpack.c.h.b16 %v184
    %v500 = vunpack.c.l.b16 %v185
    %v501 = vunpack.c.h.b16 %v185
    %v502 = vunpack.c.l.b16 %v186
    %v503 = vunpack.c.h.b16 %v186
    %v504 = vunpack.c.l.b16 %v187
    %v505 = vunpack.c.h.b16 %v187
    %v506 = vunpack.c.l.b16 %v188
    %v507 = vunpack.c.h.b16 %v188
    %v508 = vunpack.c.l.b16 %v189
    %v509 = vunpack.c.h.b16 %v189
    %v510 = vunpack.c.l.b16 %v190
    %v511 = vunpack.c.h.b16 %v190
    %v512 = vunpack.c.l.b16 %v191
    %v513 = vunpack.c.h.b16 %v191
    %v514 = vunpack.c.l.b16 %v192
    %v515 = vunpack.c.h.b16 %v192
    %v516 = vunpack.c.l.b16 %v193
    %v517 = vunpack.c.h.b16 %v193
    %v518 = vunpack.c.l.b16 %v194
    %v519 = vunpack.c.h.b16 %v194
    %v520 = vunpack.c.l.b16 %v195
    %v521 = vunpack.c.h.b16 %v195
    %v522 = vunpack.c.l.b16 %v196
    %v523 = vunpack.c.h.b16 %v196
    %v524 = vunpack.c.l.b16 %v197
    %v525 = vunpack.c.h.b16 %v197
    %v526 = vunpack.c.l.b16 %v198
    %v527 = vunpack.c.h.b16 %v198
    %v528 = vunpack.c.l.b16 %v199
    %v529 = vunpack.c.h.b16 %v199
    %v530 = vunpack.c.l.b16 %v200
    %v531 = vunpack.c.h.b16 %v200
    %v532 = vunpack.c.l.b16 %v201
    %v533 = vunpack.c.h.b16 %v201
    %v534 = vunpack.c.l.b16 %v202
    %v535 = vunpack.c.h.b16 %v202
    %v536 = vunpack.c.l.b16 %v203
    %v537 = vunpack.c.h.b16 %v203
    %v538 = vunpack.c.l.b16 %v204
    %v539 = vunpack.c.h.b16 %v204
    %v540 = vunpack.c.l.b16 %v205
    %v541 = vunpack.c.h.b16 %v205
    %v542 = vunpack.c.l.b16 %v206
    %v543 = vunpack.c.h.b16 %v206
    %v544 = vunpack.c.l.b16 %v207
    %v545 = vunpack.c.h.b16 %v207
    %v546 = vunpack.c.l.b16 %v208
    %v547 = vunpack.c.h.b16 %v208
    %v548 = vunpack.c.l.b16 %v209
    %v549 = vunpack.c.h.b16 %v209
    %v550 = vunpack.c.l.b16 %v210
    %v551 = vunpack.c.h.b16 %v210
    %v552 = vunpack.c.l.b16 %v211
    %v553 = vunpack.c.h.b16 %v211
    %v554 = vunpack.c.l.b16 %v212
    %v555 = vunpack.c.h.b16 %v212
    %v556 = vunpack.c.l.b16 %v213
    %v557 = vunpack.c.h.b16 %v213
    %v558 = vunpack.c.l.b16 %v214
    %v559 = vunpack.c.h.b16 %v214
    %v560 = vunpack.c.l.b16 %v215
    %v561 = vunpack.c.h.b16 %v215
    %v562 = vunpack.c.l.b16 %v216
    %v563 = vunpack.c.h.b16 %v216
    %v564 = vunpack.c.l.b16 %v217
    %v565 = vunpack.c.h.b16 %v217
    %v566 = vunpack.c.l.b16 %v218
    %v567 = vunpack.c.h.b16 %v218
    %v568 = vunpack.c.l.b16 %v219
    %v569 = vunpack.c.h.b16 %v219
    %v570 = vunpack.c.l.b16 %v220
    %v571 = vunpack.c.h.b16 %v220
    %v572 = vunpack.c.l.b16 %v221
    %v573 = vunpack.c.h.b16 %v221
    %v574 = vunpack.c.l.b16 %v222
    %v575 = vunpack.c.h.b16 %v222
    %v576 = vunpack.c.l.b16 %v223
    %v577 = vunpack.c.h.b16 %v223
    %v578 = vunpack.c.l.b16 %v224
    %v579 = vunpack.c.h.b16 %v224
    %v580 = vunpack.c.l.b16 %v225
    %v581 = vunpack.c.h.b16 %v225
    %v582 = vunpack.c.l.b16 %v226
    %v583 = vunpack.c.h.b16 %v226
    %v584 = vunpack.c.l.b16 %v227
    %v585 = vunpack.c.h.b16 %v227
    %v586 = vunpack.c.l.b16 %v228
    %v587 = vunpack.c.h.b16 %v228
    %v588 = vunpack.c.l.b16 %v229
    %v589 = vunpack.c.h.b16 %v229
    %v590 = vunpack.c.l.b16 %v230
    %v591 = vunpack.c.h.b16 %v230
    %v592 = vunpack.c.l.b16 %v231
    %v593 = vunpack.c.h.b16 %v231
    %v594 = vunpack.c.l.b16 %v232
    %v595 = vunpack.c.h.b16 %v232
    %v596 = vunpack.c.l.b16 %v233
    %v597 = vunpack.c.h.b16 %v233
    %v598 = vunpack.c.l.b16 %v234
    %v599 = vunpack.c.h.b16 %v234
    %v600 = vunpack.c.l.b16 %v235
    %v601 = vunpack.c.h.b16 %v235
    %v602 = vunpack.c.l.b16 %v236
    %v603 = vunpack.c.h.b16 %v236
    %v604 = vunpack.c.l.b16 %v237
    %v605 = vunpack.c.h.b16 %v237
    %v606 = vunpack.c.l.b16 %v238
    %v607 = vunpack.c.h.b16 %v238
    %v608 = vunpack.c.l.b16 %v239
    %v609 = vunpack.c.h.b16 %v239
    %v610 = vunpack.c.l.b16 %v240
    %v611 = vunpack.c.h.b16 %v240
    %v612 = vunpack.c.l.b16 %v241
    %v613 = vunpack.c.h.b16 %v241
    %v614 = vunpack.c.l.b16 %v242
    %v615 = vunpack.c.h.b16 %v242
    %v616 = vunpack.c.l.b16 %v243
    %v617 = vunpack.c.h.b16 %v243
    %v618 = vunpack.c.l.b16 %v244
    %v619 = vunpack.c.h.b16 %v244
    %v620 = vunpack.c.l.b16 %v245
    %v621 = vunpack.c.h.b16 %v245
    %v622 = vunpack.c.l.b16 %v246
    %v623 = vunpack.c.h.b16 %v246
    %v624 = vunpack.c.l.b16 %v247
    %v625 = vunpack.c.h.b16 %v247
    %v626 = vunpack.c.l.b16 %v248
    %v627 = vunpack.c.h.b16 %v248
    %v628 = vunpack.c.l.b16 %v249
    %v629 = vunpack.c.h.b16 %v249
    %v630 = vunpack.c.l.b16 %v250
    %v631 = vunpack.c.h.b16 %v250
    %v632 = vunpack.c.l.b16 %v251
    %v633 = vunpack.c.h.b16 %v251
    %v634 = vunpack.c.l.b16 %v252
    %v635 = vunpack.c.h.b16 %v252
    %v636 = vunpack.c.l.b16 %v253
    %v637 = vunpack.c.h.b16 %v253
    %v638 = vunpack.c.l.b16 %v254
    %v639 = vunpack.c.h.b16 %v254
    %v640 = vunpack.c.l.b16 %v255
    %v641 = vunpack.c.h.b16 %v255
    %v642 = vunpack.c.l.b16 %v256
    %v643 = vunpack.c.h.b16 %v256
    %v644 = vunpack.c.l.b16 %v257
    %v645 = vunpack.c.h.b16 %v257
    %v646 = vunpack.c.l.b16 %v258
    %v647 = vunpack.c.h.b16 %v258
    %v648 = vunpack.c.l.b16 %v259
    %v649 = vunpack.c.h.b16 %v259
    %v650 = vunpack.c.l.b16 %v260
    %v651 = vunpack.c.h.b16 %v260
    %v652 = vunpack.c.l.b16 %v261
    %v653 = vunpack.c.h.b16 %v261
    %v654 = vunpack.c.l.b16 %v262
    %v655 = vunpack.c.h.b16 %v262
    %v656 = vunpack.c.l.b16 %v263
    %v657 = vunpack.c.h.b16 %v263
    %v658 = vunpack.c.l.b16 %v264
    %v659 = vunpack.c.h.b16 %v264
    %v660 = vpack.c.b16 %v406, %v404
    %v661 = vpack.c.b16 %v407, %v405
    %v662 = vpack.c.b16 %v410, %v408
    %v663 = vpack.c.b16 %v411, %v409
    %v664 = vpack.c.b16 %v414, %v412
    %v665 = vpack.c.b16 %v415, %v413
    %v666 = vpack.c.b16 %v418, %v416
    %v667 = vpack.c.b16 %v419, %v417
    %v668 = vpack.c.b16 %v422, %v420
    %v669 = vpack.c.b16 %v423, %v421
    %v670 = vpack.c.b16 %v426, %v424
    %v671 = vpack.c.b16 %v427, %v425
    %v672 = vpack.c.b16 %v430, %v428
    %v673 = vpack.c.b16 %v431, %v429
    %v674 = vpack.c.b16 %v434, %v432
    %v675 = vpack.c.b16 %v435, %v433
    %v676 = vpack.c.b16 %v438, %v436
    %v677 = vpack.c.b16 %v439, %v437
    %v678 = vpack.c.b16 %v442, %v440
    %v679 = vpack.c.b16 %v443, %v441
    %v680 = vpack.c.b16 %v446, %v444
    %v681 = vpack.c.b16 %v447, %v445
    %v682 = vpack.c.b16 %v450, %v448
    %v683 = vpack.c.b16 %v451, %v449
    %v684 = vpack.c.b16 %v454, %v452
    %v685 = vpack.c.b16 %v455, %v453
    %v686 = vpack.c.b16 %v458, %v456
    %v687 = vpack.c.b16 %v459, %v457
    %v688 = vpack.c.b16 %v462, %v460
    %v689 = vpack.c.b16 %v463, %v461
    %v690 = vpack.c.b16 %v466, %v464
    %v691 = vpack.c.b16 %v467, %v465
    %v692 = vpack.c.b16 %v470, %v468
    %v693 = vpack.c.b16 %v471, %v469
    %v694 = vpack.c.b16 %v474, %v472
    %v695 = vpack.c.b16 %v475, %v473
    %v696 = vpack.c.b16 %v478, %v476
    %v697 = vpack.c.b16 %v479, %v477
    %v698 = vpack.c.b16 %v482, %v480
    %v699 = vpack.c.b16 %v483, %v481
    %v700 = vpack.c.b16 %v486, %v484
    %v701 = vpack.c.b16 %v487, %v485
    %v702 = vpack.c.b16 %v490, %v488
    %v703 = vpack.c.b16 %v491, %v489
    %v704 = vpack.c.b16 %v494, %v492
    %v705 = vpack.c.b16 %v495, %v493
    %v706 = vpack.c.b16 %v498, %v496
    %v707 = vpack.c.b16 %v499, %v497
    %v708 = vpack.c.b16 %v502, %v500
    %v709 = vpack.c.b16 %v503, %v501
    %v710 = vpack.c.b16 %v506, %v504
    %v711 = vpack.c.b16 %v507, %v505
    %v712 = vpack.c.b16 %v510, %v508
    %v713 = vpack.c.b16 %v511, %v509
    %v714 = vpack.c.b16 %v514, %v512
    %v715 = vpack.c.b16 %v515, %v513
    %v716 = vpack.c.b16 %v518, %v516
    %v717 = vpack.c.b16 %v519, %v517
    %v718 = vpack.c.b16 %v522, %v520
    %v719 = vpack.c.b16 %v523, %v521
    %v720 = vpack.c.b16 %v526, %v524
    %v721 = vpack.c.b16 %v527, %v525
    %v722 = vpack.c.b16 %v530, %v528
    %v723 = vpack.c.b16 %v531, %v529
    %v724 = vpack.c.b16 %v534, %v532
    %v725 = vpack.c.b16 %v535, %v533
    %v726 = vpack.c.b16 %v538, %v536
    %v727 = vpack.c.b16 %v539, %v537
    %v728 = vpack.c.b16 %v542, %v540
    %v729 = vpack.c.b16 %v543, %v541
    %v730 = vpack.c.b16 %v546, %v544
    %v731 = vpack.c.b16 %v547, %v545
    %v732 = vpack.c.b16 %v550, %v548
    %v733 = vpack.c.b16 %v551, %v549
    %v734 = vpack.c.b16 %v554, %v552
    %v735 = vpack.c.b16 %v555, %v553
    %v736 = vpack.c.b16 %v558, %v556
    %v737 = vpack.c.b16 %v559, %v557
    %v738 = vpack.c.b16 %v562, %v560
    %v739 = vpack.c.b16 %v563, %v561
    %v740 = vpack.c.b16 %v566, %v564
    %v741 = vpack.c.b16 %v567, %v565
    %v742 = vpack.c.b16 %v570, %v568
    %v743 = vpack.c.b16 %v571, %v569
    %v744 = vpack.c.b16 %v574, %v572
    %v745 = vpack.c.b16 %v575, %v573
    %v746 = vpack.c.b16 %v578, %v576
    %v747 = vpack.c.b16 %v579, %v577
    %v748 = vpack.c.b16 %v582, %v580
    %v749 = vpack.c.b16 %v583, %v581
    %v750 = vpack.c.b16 %v586, %v584
    %v751 = vpack.c.b16 %v587, %v585
    %v752 = vpack.c.b16 %v590, %v588
    %v753 = vpack.c.b16 %v591, %v589
    %v754 = vpack.c.b16 %v594, %v592
    %v755 = vpack.c.b16 %v595, %v593
    %v756 = vpack.c.b16 %v598, %v596
    %v757 = vpack.c.b16 %v599, %v597
    %v758 = vpack.c.b16 %v602, %v600
    %v759 = vpack.c.b16 %v603, %v601
    %v760 = vpack.c.b16 %v606, %v604
    %v761 = vpack.c.b16 %v607, %v605
    %v762 = vpack.c.b16 %v610, %v608
    %v763 = vpack.c.b16 %v611, %v609
    %v764 = vpack.c.b16 %v614, %v612
    %v765 = vpack.c.b16 %v615, %v613
    %v766 = vpack.c.b16 %v618, %v616
    %v767 = vpack.c.b16 %v619, %v617
    %v768 = vpack.c.b16 %v622, %v620
    %v769 = vpack.c.b16 %v623, %v621
    %v770 = vpack.c.b16 %v626, %v624
    %v771 = vpack.c.b16 %v627, %v625
    %v772 = vpack.c.b16 %v630, %v628
    %v773 = vpack.c.b16 %v631, %v629
    %v774 = vpack.c.b16 %v634, %v632
    %v775 = vpack.c.b16 %v635, %v633
    %v776 = vpack.c.b16 %v638, %v636
    %v777 = vpack.c.b16 %v639, %v637
    %v778 = vpack.c.b16 %v642, %v640
    %v779 = vpack.c.b16 %v643, %v641
    %v780 = vpack.c.b16 %v646, %v644
    %v781 = vpack.c.b16 %v647, %v645
    %v782 = vpack.c.b16 %v650, %v648
    %v783 = vpack.c.b16 %v651, %v649
    %v784 = vpack.c.b16 %v654, %v652
    %v785 = vpack.c.b16 %v655, %v653
    %v786 = vpack.c.b16 %v658, %v656
    %v787 = vpack.c.b16 %v659, %v657
    %916 = vmatprep.subr.bf16.mxu0 %v661
    %917 = vmatpush1.bf16.msra.mxu0 %v660
    %918 = vmatprep.subr.bf16.mxu0 %v663
    %919 = vmatpush1.bf16.msra.mxu0 %v662
    %920 = vmatprep.subr.bf16.mxu0 %v665
    %921 = vmatpush1.bf16.msra.mxu0 %v664
    %922 = vmatprep.subr.bf16.mxu0 %v667
    %923 = vmatpush1.bf16.msra.mxu0 %v666
    %924 = vmatprep.subr.bf16.mxu0 %v669
    %925 = vmatpush1.bf16.msra.mxu0 %v668
    %926 = vmatprep.subr.bf16.mxu0 %v671
    %927 = vmatpush1.bf16.msra.mxu0 %v670
    %928 = vmatprep.subr.bf16.mxu0 %v673
    %929 = vmatpush1.bf16.msra.mxu0 %v672
    %930 = vmatprep.subr.bf16.mxu0 %v675
    %931 = vmatpush1.bf16.msra.mxu0 %v674
    %932 = vmatprep.subr.bf16.mxu0 %v677
    %933 = vmatpush1.bf16.msra.mxu0 %v676
    %934 = vmatprep.subr.bf16.mxu0 %v679
    %935 = vmatpush1.bf16.msra.mxu0 %v678
    %936 = vmatprep.subr.bf16.mxu0 %v681
    %937 = vmatpush1.bf16.msra.mxu0 %v680
    %938 = vmatprep.subr.bf16.mxu0 %v683
    %939 = vmatpush1.bf16.msra.mxu0 %v682
    %940 = vmatprep.subr.bf16.mxu0 %v685
    %941 = vmatpush1.bf16.msra.mxu0 %v684
    %942 = vmatprep.subr.bf16.mxu0 %v687
    %943 = vmatpush1.bf16.msra.mxu0 %v686
    %944 = vmatprep.subr.bf16.mxu0 %v689
    %945 = vmatpush1.bf16.msra.mxu0 %v688
    %946 = vmatprep.subr.bf16.mxu0 %v691
    %947 = vmatpush1.bf16.msra.mxu0 %v690
    %948 = vmatprep.mubr.bf16.mxu0 %v130
    %949 = vmatmul.mubr.bf16.gmra.mrb[0].mxu0 %v129
    %v950 = vpop.f32.mrb[0].mxu0
    %v951 = vadd.f32 %v269, %v950
    %v952 = vpop.f32.mrb[0].mxu0
    %v953 = vadd.f32 %v273, %v952
    %v954 = vpop.f32.mrb[0].mxu0
    %v955 = vpop.f32.mrb[0].mxu0
    %956 = vdwg.mxu0
    %957 = vmatprep.subr.bf16.mxu0 %v693
    %958 = vmatpush1.bf16.msra.mxu0 %v692
    %959 = vmatprep.subr.bf16.mxu0 %v695
    %960 = vmatpush1.bf16.msra.mxu0 %v694
    %961 = vmatprep.subr.bf16.mxu0 %v697
    %962 = vmatpush1.bf16.msra.mxu0 %v696
    %963 = vmatprep.subr.bf16.mxu0 %v699
    %964 = vmatpush1.bf16.msra.mxu0 %v698
    %965 = vmatprep.subr.bf16.mxu0 %v701
    %966 = vmatpush1.bf16.msra.mxu0 %v700
    %967 = vmatprep.subr.bf16.mxu0 %v703
    %968 = vmatpush1.bf16.msra.mxu0 %v702
    %969 = vmatprep.subr.bf16.mxu0 %v705
    %970 = vmatpush1.bf16.msra.mxu0 %v704
    %971 = vmatprep.subr.bf16.mxu0 %v707
    %972 = vmatpush1.bf16.msra.mxu0 %v706
    %973 = vmatprep.subr.bf16.mxu0 %v709
    %974 = vmatpush1.bf16.msra.mxu0 %v708
    %975 = vmatprep.subr.bf16.mxu0 %v711
    %976 = vmatpush1.bf16.msra.mxu0 %v710
    %977 = vmatprep.subr.bf16.mxu0 %v713
    %978 = vmatpush1.bf16.msra.mxu0 %v712
    %979 = vmatprep.subr.bf16.mxu0 %v715
    %980 = vmatpush1.bf16.msra.mxu0 %v714
    %981 = vmatprep.subr.bf16.mxu0 %v717
    %982 = vmatpush1.bf16.msra.mxu0 %v716
    %983 = vmatprep.subr.bf16.mxu0 %v719
    %984 = vmatpush1.bf16.msra.mxu0 %v718
    %985 = vmatprep.subr.bf16.mxu0 %v721
    %986 = vmatpush1.bf16.msra.mxu0 %v720
    %987 = vmatprep.subr.bf16.mxu0 %v723
    %988 = vmatpush1.bf16.msra.mxu0 %v722
    %989 = vmatprep.mubr.bf16.mxu0 %v132
    %990 = vmatmul.mubr.bf16.gmra.mrb[0].mxu0 %v131
    %v991 = vpop.f32.mrb[0].mxu0
    %v992 = vadd.f32 %v951, %v991
    %v993 = vpop.f32.mrb[0].mxu0
    %v994 = vadd.f32 %v953, %v993
    %v995 = vpop.f32.mrb[0].mxu0
    %v996 = vpop.f32.mrb[0].mxu0
    %997 = vdwg.mxu0
    %998 = vmatprep.subr.bf16.mxu0 %v725
    %999 = vmatpush1.bf16.msra.mxu0 %v724
    %1000 = vmatprep.subr.bf16.mxu0 %v727
    %1001 = vmatpush1.bf16.msra.mxu0 %v726
    %1002 = vmatprep.subr.bf16.mxu0 %v729
    %1003 = vmatpush1.bf16.msra.mxu0 %v728
    %1004 = vmatprep.subr.bf16.mxu0 %v731
    %1005 = vmatpush1.bf16.msra.mxu0 %v730
    %1006 = vmatprep.subr.bf16.mxu0 %v733
    %1007 = vmatpush1.bf16.msra.mxu0 %v732
    %1008 = vmatprep.subr.bf16.mxu0 %v735
    %1009 = vmatpush1.bf16.msra.mxu0 %v734
    %1010 = vmatprep.subr.bf16.mxu0 %v737
    %1011 = vmatpush1.bf16.msra.mxu0 %v736
    %1012 = vmatprep.subr.bf16.mxu0 %v739
    %1013 = vmatpush1.bf16.msra.mxu0 %v738
    %1014 = vmatprep.subr.bf16.mxu0 %v741
    %1015 = vmatpush1.bf16.msra.mxu0 %v740
    %1016 = vmatprep.subr.bf16.mxu0 %v743
    %1017 = vmatpush1.bf16.msra.mxu0 %v742
    %1018 = vmatprep.subr.bf16.mxu0 %v745
    %1019 = vmatpush1.bf16.msra.mxu0 %v744
    %1020 = vmatprep.subr.bf16.mxu0 %v747
    %1021 = vmatpush1.bf16.msra.mxu0 %v746
    %1022 = vmatprep.subr.bf16.mxu0 %v749
    %1023 = vmatpush1.bf16.msra.mxu0 %v748
    %1024 = vmatprep.subr.bf16.mxu0 %v751
    %1025 = vmatpush1.bf16.msra.mxu0 %v750
    %1026 = vmatprep.subr.bf16.mxu0 %v753
    %1027 = vmatpush1.bf16.msra.mxu0 %v752
    %1028 = vmatprep.subr.bf16.mxu0 %v755
    %1029 = vmatpush1.bf16.msra.mxu0 %v754
    %1030 = vmatprep.mubr.bf16.mxu0 %v134
    %1031 = vmatmul.mubr.bf16.gmra.mrb[0].mxu0 %v133
    %v1032 = vpop.f32.mrb[0].mxu0
    %v1033 = vadd.f32 %v992, %v1032
    %v1034 = vpop.f32.mrb[0].mxu0
    %v1035 = vadd.f32 %v994, %v1034
    %v1036 = vpop.f32.mrb[0].mxu0
    %v1037 = vpop.f32.mrb[0].mxu0
    %1038 = vdwg.mxu0
    %1039 = vmatprep.subr.bf16.mxu0 %v757
    %1040 = vmatpush1.bf16.msra.mxu0 %v756
    %1041 = vmatprep.subr.bf16.mxu0 %v759
    %1042 = vmatpush1.bf16.msra.mxu0 %v758
    %1043 = vmatprep.subr.bf16.mxu0 %v761
    %1044 = vmatpush1.bf16.msra.mxu0 %v760
    %1045 = vmatprep.subr.bf16.mxu0 %v763
    %1046 = vmatpush1.bf16.msra.mxu0 %v762
    %1047 = vmatprep.subr.bf16.mxu0 %v765
    %1048 = vmatpush1.bf16.msra.mxu0 %v764
    %1049 = vmatprep.subr.bf16.mxu0 %v767
    %1050 = vmatpush1.bf16.msra.mxu0 %v766
    %1051 = vmatprep.subr.bf16.mxu0 %v769
    %1052 = vmatpush1.bf16.msra.mxu0 %v768
    %1053 = vmatprep.subr.bf16.mxu0 %v771
    %1054 = vmatpush1.bf16.msra.mxu0 %v770
    %1055 = vmatprep.subr.bf16.mxu0 %v773
    %1056 = vmatpush1.bf16.msra.mxu0 %v772
    %1057 = vmatprep.subr.bf16.mxu0 %v775
    %1058 = vmatpush1.bf16.msra.mxu0 %v774
    %1059 = vmatprep.subr.bf16.mxu0 %v777
    %1060 = vmatpush1.bf16.msra.mxu0 %v776
    %1061 = vmatprep.subr.bf16.mxu0 %v779
    %1062 = vmatpush1.bf16.msra.mxu0 %v778
    %1063 = vmatprep.subr.bf16.mxu0 %v781
    %1064 = vmatpush1.bf16.msra.mxu0 %v780
    %1065 = vmatprep.subr.bf16.mxu0 %v783
    %1066 = vmatpush1.bf16.msra.mxu0 %v782
    %1067 = vmatprep.subr.bf16.mxu0 %v785
    %1068 = vmatpush1.bf16.msra.mxu0 %v784
    %1069 = vmatprep.subr.bf16.mxu0 %v787
    %1070 = vmatpush1.bf16.msra.mxu0 %v786
    %1071 = vmatprep.mubr.bf16.mxu0 %v136
    %1072 = vmatmul.mubr.bf16.gmra.mrb[0].mxu0 %v135
    %v1073 = vpop.f32.mrb[0].mxu0
    %v1074 = vadd.f32 %v1033, %v1073
    %v1075 = vpop.f32.mrb[0].mxu0
    %v1076 = vadd.f32 %v1035, %v1075
    %v1077 = vpop.f32.mrb[0].mxu0
    %v1078 = vpop.f32.mrb[0].mxu0
    %1079 = vdwg.mxu0
    %v1080 = vmax.f32 %v1074, 0.0
    %v1081 = vmax.f32 %v1076, 0.0
    %v1082 = vpack.c.bf16 %v1080, %v1080
    %v1083 = vpack.c.bf16 %v1081, %v1081
    %v1084 = vld [vmem:[#allocation8] sm:$0xf]
    %v1085 = vld [vmem:[#allocation8 + $0x10] sm:$0xf]
    %v1086 = vld [vmem:[#allocation8 + $0x20] sm:$0xf]
    %v1087 = vld [vmem:[#allocation8 + $0x30] sm:$0xf]
    %v1088 = vld [vmem:[#allocation8 + $0x40] sm:$0xf]
    %v1089 = vld [vmem:[#allocation8 + $0x50] sm:$0xf]
    %v1090 = vld [vmem:[#allocation8 + $0x60] sm:$0xf]
    %v1091 = vld [vmem:[#allocation8 + $0x70] sm:$0xf]
    %v1092 = vld [vmem:[#allocation8 + $0x80] sm:$0xf]
    %v1093 = vld [vmem:[#allocation8 + $0x90] sm:$0xf]
    %v1094 = vld [vmem:[#allocation8 + $0xa0] sm:$0xf]
    %v1095 = vld [vmem:[#allocation8 + $0xb0] sm:$0xf]
    %v1096 = vld [vmem:[#allocation8 + $0xc0] sm:$0xf]
    %v1097 = vld [vmem:[#allocation8 + $0xd0] sm:$0xf]
    %v1098 = vld [vmem:[#allocation8 + $0xe0] sm:$0xf]
    %v1099 = vld [vmem:[#allocation8 + $0xf0] sm:$0xf]
    %v1100 = vld [vmem:[#allocation8 + $0x100] sm:$0xf]
    %v1101 = vld [vmem:[#allocation8 + $0x110] sm:$0xf]
    %v1102 = vld [vmem:[#allocation8 + $0x120] sm:$0xf]
    %v1103 = vld [vmem:[#allocation8 + $0x130] sm:$0xf]
    %v1104 = vld [vmem:[#allocation8 + $0x140] sm:$0xf]
    %v1105 = vld [vmem:[#allocation8 + $0x150] sm:$0xf]
    %v1106 = vld [vmem:[#allocation8 + $0x160] sm:$0xf]
    %v1107 = vld [vmem:[#allocation8 + $0x170] sm:$0xf]
    %v1108 = vld [vmem:[#allocation8 + $0x180] sm:$0xf]
    %v1109 = vld [vmem:[#allocation8 + $0x190] sm:$0xf]
    %v1110 = vld [vmem:[#allocation8 + $0x1a0] sm:$0xf]
    %v1111 = vld [vmem:[#allocation8 + $0x1b0] sm:$0xf]
    %v1112 = vld [vmem:[#allocation8 + $0x1c0] sm:$0xf]
    %v1113 = vld [vmem:[#allocation8 + $0x1d0] sm:$0xf]
    %v1114 = vld [vmem:[#allocation8 + $0x1e0] sm:$0xf]
    %v1115 = vld [vmem:[#allocation8 + $0x1f0] sm:$0xf]
    %v1148 = vunpack.c.l.b16 %v1084
    %v1149 = vunpack.c.l.b16 %v1085
    %v1150 = vunpack.c.l.b16 %v1086
    %v1151 = vunpack.c.l.b16 %v1087
    %v1152 = vunpack.c.l.b16 %v1088
    %v1153 = vunpack.c.l.b16 %v1089
    %v1154 = vunpack.c.l.b16 %v1090
    %v1155 = vunpack.c.l.b16 %v1091
    %v1156 = vunpack.c.l.b16 %v1092
    %v1157 = vunpack.c.l.b16 %v1093
    %v1158 = vunpack.c.l.b16 %v1094
    %v1159 = vunpack.c.l.b16 %v1095
    %v1160 = vunpack.c.l.b16 %v1096
    %v1161 = vunpack.c.l.b16 %v1097
    %v1162 = vunpack.c.l.b16 %v1098
    %v1163 = vunpack.c.l.b16 %v1099
    %v1164 = vunpack.c.l.b16 %v1100
    %v1165 = vunpack.c.l.b16 %v1101
    %v1166 = vunpack.c.l.b16 %v1102
    %v1167 = vunpack.c.l.b16 %v1103
    %v1168 = vunpack.c.l.b16 %v1104
    %v1169 = vunpack.c.l.b16 %v1105
    %v1170 = vunpack.c.l.b16 %v1106
    %v1171 = vunpack.c.l.b16 %v1107
    %v1172 = vunpack.c.l.b16 %v1108
    %v1173 = vunpack.c.l.b16 %v1109
    %v1174 = vunpack.c.l.b16 %v1110
    %v1175 = vunpack.c.l.b16 %v1111
    %v1176 = vunpack.c.l.b16 %v1112
    %v1177 = vunpack.c.l.b16 %v1113
    %v1178 = vunpack.c.l.b16 %v1114
    %v1179 = vunpack.c.l.b16 %v1115
    %v1180 = vpack.c.b16 %v1149, %v1148
    %v1181 = vpack.c.b16 %v1151, %v1150
    %v1182 = vpack.c.b16 %v1153, %v1152
    %v1183 = vpack.c.b16 %v1155, %v1154
    %v1184 = vpack.c.b16 %v1157, %v1156
    %v1185 = vpack.c.b16 %v1159, %v1158
    %v1186 = vpack.c.b16 %v1161, %v1160
    %v1187 = vpack.c.b16 %v1163, %v1162
    %v1188 = vpack.c.b16 %v1165, %v1164
    %v1189 = vpack.c.b16 %v1167, %v1166
    %v1190 = vpack.c.b16 %v1169, %v1168
    %v1191 = vpack.c.b16 %v1171, %v1170
    %v1192 = vpack.c.b16 %v1173, %v1172
    %v1193 = vpack.c.b16 %v1175, %v1174
    %v1194 = vpack.c.b16 %v1177, %v1176
    %v1195 = vpack.c.b16 %v1179, %v1178
    %1212 = vmatprep.subr.bf16.mxu0 0
    %1213 = vmatpush1.bf16.msra.mxu0 %v1180
    %1214 = vmatprep.subr.bf16.mxu0 0
    %1215 = vmatpush1.bf16.msra.mxu0 %v1181
    %1216 = vmatprep.subr.bf16.mxu0 0
    %1217 = vmatpush1.bf16.msra.mxu0 %v1182
    %1218 = vmatprep.subr.bf16.mxu0 0
    %1219 = vmatpush1.bf16.msra.mxu0 %v1183
    %1220 = vmatprep.subr.bf16.mxu0 0
    %1221 = vmatpush1.bf16.msra.mxu0 %v1184
    %1222 = vmatprep.subr.bf16.mxu0 0
    %1223 = vmatpush1.bf16.msra.mxu0 %v1185
    %1224 = vmatprep.subr.bf16.mxu0 0
    %1225 = vmatpush1.bf16.msra.mxu0 %v1186
    %1226 = vmatprep.subr.bf16.mxu0 0
    %1227 = vmatpush1.bf16.msra.mxu0 %v1187
    %1228 = vmatprep.subr.bf16.mxu0 0
    %1229 = vmatpush1.bf16.msra.mxu0 %v1188
    %1230 = vmatprep.subr.bf16.mxu0 0
    %1231 = vmatpush1.bf16.msra.mxu0 %v1189
    %1232 = vmatprep.subr.bf16.mxu0 0
    %1233 = vmatpush1.bf16.msra.mxu0 %v1190
    %1234 = vmatprep.subr.bf16.mxu0 0
    %1235 = vmatpush1.bf16.msra.mxu0 %v1191
    %1236 = vmatprep.subr.bf16.mxu0 0
    %1237 = vmatpush1.bf16.msra.mxu0 %v1192
    %1238 = vmatprep.subr.bf16.mxu0 0
    %1239 = vmatpush1.bf16.msra.mxu0 %v1193
    %1240 = vmatprep.subr.bf16.mxu0 0
    %1241 = vmatpush1.bf16.msra.mxu0 %v1194
    %1242 = vmatprep.subr.bf16.mxu0 0
    %1243 = vmatpush1.bf16.msra.mxu0 %v1195
    %1244 = vmatprep.mubr.bf16.mxu0 %v1083
    %1245 = vmatmul.mubr.bf16.gmra.mrb[0].mxu0 %v1082
    %v1246 = vpop.f32.mrb[0].mxu0
    %v1247 = vadd.f32 %v104, %v1246
    %v1248 = vpop.f32.mrb[0].mxu0
    %v1249 = vpop.f32.mrb[0].mxu0
    %v1250 = vpop.f32.mrb[0].mxu0
    %1251 = vdwg.mxu0
    %v1252 = vmax.f32 %v1247, 0.0
    %v1253 = vld [vmem:[#allocation10] sm:$0xff]
    %v1254 = vld [vmem:[#allocation10 + $0x8] sm:$0xff]
    %v1255 = vld [vmem:[#allocation10 + $0x10] sm:$0xff]
    %v1256 = vld [vmem:[#allocation10 + $0x18] sm:$0xff]
    %v1257 = vld [vmem:[#allocation10 + $0x20] sm:$0xff]
    %v1258 = vld [vmem:[#allocation10 + $0x28] sm:$0xff]
    %v1259 = vld [vmem:[#allocation10 + $0x30] sm:$0xff]
    %v1260 = vld [vmem:[#allocation10 + $0x38] sm:$0xff]
    %v1261 = vld [vmem:[#allocation10 + $0x40] sm:$0xff]
    %v1262 = vld [vmem:[#allocation10 + $0x48] sm:$0xff]
    %v1263 = vld [vmem:[#allocation10 + $0x50] sm:$0xff]
    %v1264 = vld [vmem:[#allocation10 + $0x58] sm:$0xff]
    %v1265 = vld [vmem:[#allocation10 + $0x60] sm:$0xff]
    %v1266 = vld [vmem:[#allocation10 + $0x68] sm:$0xff]
    %v1267 = vld [vmem:[#allocation10 + $0x70] sm:$0xff]
    %v1268 = vld [vmem:[#allocation10 + $0x78] sm:$0xff]
    %1269 = vmatprep.subr.mxu0 0.0
    %1270 = vmatpush1.msra.mxu0 %v1253
    %1271 = vmatprep.subr.mxu0 0.0
    %1272 = vmatpush1.msra.mxu0 %v1254
    %1273 = vmatprep.subr.mxu0 0.0
    %1274 = vmatpush1.msra.mxu0 %v1255
    %1275 = vmatprep.subr.mxu0 0.0
    %1276 = vmatpush1.msra.mxu0 %v1256
    %1277 = vmatprep.subr.mxu0 0.0
    %1278 = vmatpush1.msra.mxu0 %v1257
    %1279 = vmatprep.subr.mxu0 0.0
    %1280 = vmatpush1.msra.mxu0 %v1258
    %1281 = vmatprep.subr.mxu0 0.0
    %1282 = vmatpush1.msra.mxu0 %v1259
    %1283 = vmatprep.subr.mxu0 0.0
    %1284 = vmatpush1.msra.mxu0 %v1260
    %1285 = vmatprep.subr.mxu0 0.0
    %1286 = vmatpush1.msra.mxu0 %v1261
    %1287 = vmatprep.subr.mxu0 0.0
    %1288 = vmatpush1.msra.mxu0 %v1262
    %1289 = vmatprep.subr.mxu0 0.0
    %1290 = vmatpush1.msra.mxu0 %v1263
    %1291 = vmatprep.subr.mxu0 0.0
    %1292 = vmatpush1.msra.mxu0 %v1264
    %1293 = vmatprep.subr.mxu0 0.0
    %1294 = vmatpush1.msra.mxu0 %v1265
    %1295 = vmatprep.subr.mxu0 0.0
    %1296 = vmatpush1.msra.mxu0 %v1266
    %1297 = vmatprep.subr.mxu0 0.0
    %1298 = vmatpush1.msra.mxu0 %v1267
    %1299 = vmatprep.subr.mxu0 0.0
    %1300 = vmatpush1.msra.mxu0 %v1268
    %1301 = vmatprep.subr.mxu0 0.0
    %1302 = vmatpush1.msra.mxu0 0.0
    %1303 = vmatprep.subr.mxu0 0.0
    %1304 = vmatpush1.msra.mxu0 0.0
    %1305 = vmatprep.subr.mxu0 0.0
    %1306 = vmatpush1.msra.mxu0 0.0
    %1307 = vmatprep.subr.mxu0 0.0
    %1308 = vmatpush1.msra.mxu0 0.0
    %1309 = vmatprep.subr.mxu0 0.0
    %1310 = vmatpush1.msra.mxu0 0.0
    %1311 = vmatprep.subr.mxu0 0.0
    %1312 = vmatpush1.msra.mxu0 0.0
    %1313 = vmatprep.subr.mxu0 0.0
    %1314 = vmatpush1.msra.mxu0 0.0
    %1315 = vmatprep.subr.mxu0 0.0
    %1316 = vmatpush1.msra.mxu0 0.0
    %1317 = vmatprep.subr.mxu0 0.0
    %1318 = vmatpush1.msra.mxu0 0.0
    %1319 = vmatprep.subr.mxu0 0.0
    %1320 = vmatpush1.msra.mxu0 0.0
    %1321 = vmatprep.subr.mxu0 0.0
    %1322 = vmatpush1.msra.mxu0 0.0
    %1323 = vmatprep.subr.mxu0 0.0
    %1324 = vmatpush1.msra.mxu0 0.0
    %1325 = vmatprep.subr.mxu0 0.0
    %1326 = vmatpush1.msra.mxu0 0.0
    %1327 = vmatprep.subr.mxu0 0.0
    %1328 = vmatpush1.msra.mxu0 0.0
    %1329 = vmatprep.subr.mxu0 0.0
    %1330 = vmatpush1.msra.mxu0 0.0
    %1331 = vmatprep.subr.mxu0 0.0
    %1332 = vmatpush1.msra.mxu0 0.0
    %1333 = vmatprep.mubr.f32.mxu0 0.0
    %1334 = vmatmul.mubr.f32.gmra.mrb[0].mxu0 %v1252
    %v1335 = vpop.f32.mrb[0].mxu0
    %v1336 = vadd.f32 %v105, %v1335
    %v1337 = vpop.f32.mrb[0].mxu0
    %1338 = vdwg.mxu0
    %v1339 = vmax.f32 %v1336, 0.0
    %v1340 = vpack.c.bf16 %v1339, %v1339
    %v1341 = vld [vmem:[#allocation8 + $0x4] sm:$0xf]
    %v1342 = vld [vmem:[#allocation8 + $0x14] sm:$0xf]
    %v1343 = vld [vmem:[#allocation8 + $0x24] sm:$0xf]
    %v1344 = vld [vmem:[#allocation8 + $0x34] sm:$0xf]
    %v1345 = vld [vmem:[#allocation8 + $0x44] sm:$0xf]
    %v1346 = vld [vmem:[#allocation8 + $0x54] sm:$0xf]
    %v1347 = vld [vmem:[#allocation8 + $0x64] sm:$0xf]
    %v1348 = vld [vmem:[#allocation8 + $0x74] sm:$0xf]
    %v1349 = vld [vmem:[#allocation8 + $0x84] sm:$0xf]
    %v1350 = vld [vmem:[#allocation8 + $0x94] sm:$0xf]
    %v1351 = vld [vmem:[#allocation8 + $0xa4] sm:$0xf]
    %v1352 = vld [vmem:[#allocation8 + $0xb4] sm:$0xf]
    %v1353 = vld [vmem:[#allocation8 + $0xc4] sm:$0xf]
    %v1354 = vld [vmem:[#allocation8 + $0xd4] sm:$0xf]
    %v1355 = vld [vmem:[#allocation8 + $0xe4] sm:$0xf]
    %v1356 = vld [vmem:[#allocation8 + $0xf4] sm:$0xf]
    %v1373 = vunpack.c.l.b16 %v1341
    %v1374 = vunpack.c.l.b16 %v1342
    %v1375 = vunpack.c.l.b16 %v1343
    %v1376 = vunpack.c.l.b16 %v1344
    %v1377 = vunpack.c.l.b16 %v1345
    %v1378 = vunpack.c.l.b16 %v1346
    %v1379 = vunpack.c.l.b16 %v1347
    %v1380 = vunpack.c.l.b16 %v1348
    %v1381 = vunpack.c.l.b16 %v1349
    %v1382 = vunpack.c.l.b16 %v1350
    %v1383 = vunpack.c.l.b16 %v1351
    %v1384 = vunpack.c.l.b16 %v1352
    %v1385 = vunpack.c.l.b16 %v1353
    %v1386 = vunpack.c.l.b16 %v1354
    %v1387 = vunpack.c.l.b16 %v1355
    %v1388 = vunpack.c.l.b16 %v1356
    %v1389 = vpack.c.b16 %v1374, %v1373
    %v1390 = vpack.c.b16 %v1376, %v1375
    %v1391 = vpack.c.b16 %v1378, %v1377
    %v1392 = vpack.c.b16 %v1380, %v1379
    %v1393 = vpack.c.b16 %v1382, %v1381
    %v1394 = vpack.c.b16 %v1384, %v1383
    %v1395 = vpack.c.b16 %v1386, %v1385
    %v1396 = vpack.c.b16 %v1388, %v1387
    %1405 = vmatprep.subr.bf16.mxu0 0
    %1406 = vmatpush1.bf16.msra.mxu0 %v1389
    %1407 = vmatprep.subr.bf16.mxu0 0
    %1408 = vmatpush1.bf16.msra.mxu0 %v1390
    %1409 = vmatprep.subr.bf16.mxu0 0
    %1410 = vmatpush1.bf16.msra.mxu0 %v1391
    %1411 = vmatprep.subr.bf16.mxu0 0
    %1412 = vmatpush1.bf16.msra.mxu0 %v1392
    %1413 = vmatprep.subr.bf16.mxu0 0
    %1414 = vmatpush1.bf16.msra.mxu0 %v1393
    %1415 = vmatprep.subr.bf16.mxu0 0
    %1416 = vmatpush1.bf16.msra.mxu0 %v1394
    %1417 = vmatprep.subr.bf16.mxu0 0
    %1418 = vmatpush1.bf16.msra.mxu0 %v1395
    %1419 = vmatprep.subr.bf16.mxu0 0
    %1420 = vmatpush1.bf16.msra.mxu0 %v1396
    %1421 = vmatprep.subr.bf16.mxu0 0
    %1422 = vmatpush1.bf16.msra.mxu0 0
    %1423 = vmatprep.subr.bf16.mxu0 0
    %1424 = vmatpush1.bf16.msra.mxu0 0
    %1425 = vmatprep.subr.bf16.mxu0 0
    %1426 = vmatpush1.bf16.msra.mxu0 0
    %1427 = vmatprep.subr.bf16.mxu0 0
    %1428 = vmatpush1.bf16.msra.mxu0 0
    %1429 = vmatprep.subr.bf16.mxu0 0
    %1430 = vmatpush1.bf16.msra.mxu0 0
    %1431 = vmatprep.subr.bf16.mxu0 0
    %1432 = vmatpush1.bf16.msra.mxu0 0
    %1433 = vmatprep.subr.bf16.mxu0 0
    %1434 = vmatpush1.bf16.msra.mxu0 0
    %1435 = vmatprep.subr.bf16.mxu0 0
    %1436 = vmatpush1.bf16.msra.mxu0 0
    %1437 = vmatprep.mubr.bf16.mxu0 0
    %1438 = vmatmul.mubr.bf16.gmra.mrb[0].mxu0 %v1340
    %v1439 = vpop.f32.mrb[0].mxu0
    %v1440 = vadd.f32 %v106, %v1439
    %v1441 = vpop.f32.mrb[0].mxu0
    %v1442 = vpop.f32.mrb[0].mxu0
    %v1443 = vpop.f32.mrb[0].mxu0
    %1444 = vdwg.mxu0
    %v1445 = vmax.f32 %v1440, 0.0
    %v1446 = vpack.c.bf16 %v1445, %v1445
    %v1447 = vld [vmem:[#allocation8 + $0x8] sm:$0xff]
    %v1448 = vld [vmem:[#allocation8 + $0x18] sm:$0xff]
    %v1449 = vld [vmem:[#allocation8 + $0x28] sm:$0xff]
    %v1450 = vld [vmem:[#allocation8 + $0x38] sm:$0xff]
    %v1451 = vld [vmem:[#allocation8 + $0x48] sm:$0xff]
    %v1452 = vld [vmem:[#allocation8 + $0x58] sm:$0xff]
    %v1453 = vld [vmem:[#allocation8 + $0x68] sm:$0xff]
    %v1454 = vld [vmem:[#allocation8 + $0x78] sm:$0xff]
    %v1455 = vld [vmem:[#allocation8 + $0x88] sm:$0xff]
    %v1456 = vld [vmem:[#allocation8 + $0x98] sm:$0xff]
    %v1457 = vld [vmem:[#allocation8 + $0xa8] sm:$0xff]
    %v1458 = vld [vmem:[#allocation8 + $0xb8] sm:$0xff]
    %v1459 = vld [vmem:[#allocation8 + $0xc8] sm:$0xff]
    %v1460 = vld [vmem:[#allocation8 + $0xd8] sm:$0xff]
    %v1461 = vld [vmem:[#allocation8 + $0xe8] sm:$0xff]
    %v1462 = vld [vmem:[#allocation8 + $0xf8] sm:$0xff]
    %v1464 = vlaneseq
    %v1465 = vshrl.u32 %v1464, 7
    %v1466 = vsub.s32 0, %v1465
    %v1467 = vrot.slane %v108, %v1466
    %v1468 = vlaneseq
    %v1469 = vshrl.u32 %v1468, 7
    %v1470 = vsub.s32 1, %v1469
    %v1471 = vrot.slane %v108, %v1470
    %v1490 = vunpack.c.l.b16 %v1447
    %v1491 = vunpack.c.h.b16 %v1447
    %v1492 = vunpack.c.l.b16 %v1448
    %v1493 = vunpack.c.h.b16 %v1448
    %v1494 = vunpack.c.l.b16 %v1449
    %v1495 = vunpack.c.h.b16 %v1449
    %v1496 = vunpack.c.l.b16 %v1450
    %v1497 = vunpack.c.h.b16 %v1450
    %v1498 = vunpack.c.l.b16 %v1451
    %v1499 = vunpack.c.h.b16 %v1451
    %v1500 = vunpack.c.l.b16 %v1452
    %v1501 = vunpack.c.h.b16 %v1452
    %v1502 = vunpack.c.l.b16 %v1453
    %v1503 = vunpack.c.h.b16 %v1453
    %v1504 = vunpack.c.l.b16 %v1454
    %v1505 = vunpack.c.h.b16 %v1454
    %v1506 = vunpack.c.l.b16 %v1455
    %v1507 = vunpack.c.h.b16 %v1455
    %v1508 = vunpack.c.l.b16 %v1456
    %v1509 = vunpack.c.h.b16 %v1456
    %v1510 = vunpack.c.l.b16 %v1457
    %v1511 = vunpack.c.h.b16 %v1457
    %v1512 = vunpack.c.l.b16 %v1458
    %v1513 = vunpack.c.h.b16 %v1458
    %v1514 = vunpack.c.l.b16 %v1459
    %v1515 = vunpack.c.h.b16 %v1459
    %v1516 = vunpack.c.l.b16 %v1460
    %v1517 = vunpack.c.h.b16 %v1460
    %v1518 = vunpack.c.l.b16 %v1461
    %v1519 = vunpack.c.h.b16 %v1461
    %v1520 = vunpack.c.l.b16 %v1462
    %v1521 = vunpack.c.h.b16 %v1462
    %v1522 = vpack.c.b16 %v1492, %v1490
    %v1523 = vpack.c.b16 %v1493, %v1491
    %v1524 = vpack.c.b16 %v1496, %v1494
    %v1525 = vpack.c.b16 %v1497, %v1495
    %v1526 = vpack.c.b16 %v1500, %v1498
    %v1527 = vpack.c.b16 %v1501, %v1499
    %v1528 = vpack.c.b16 %v1504, %v1502
    %v1529 = vpack.c.b16 %v1505, %v1503
    %v1530 = vpack.c.b16 %v1508, %v1506
    %v1531 = vpack.c.b16 %v1509, %v1507
    %v1532 = vpack.c.b16 %v1512, %v1510
    %v1533 = vpack.c.b16 %v1513, %v1511
    %v1534 = vpack.c.b16 %v1516, %v1514
    %v1535 = vpack.c.b16 %v1517, %v1515
    %v1536 = vpack.c.b16 %v1520, %v1518
    %v1537 = vpack.c.b16 %v1521, %v1519
    %1554 = vmatprep.subr.bf16.mxu0 %v1523
    %1555 = vmatpush1.bf16.msra.mxu0 %v1522
    %1556 = vmatprep.subr.bf16.mxu0 %v1525
    %1557 = vmatpush1.bf16.msra.mxu0 %v1524
    %1558 = vmatprep.subr.bf16.mxu0 %v1527
    %1559 = vmatpush1.bf16.msra.mxu0 %v1526
    %1560 = vmatprep.subr.bf16.mxu0 %v1529
    %1561 = vmatpush1.bf16.msra.mxu0 %v1528
    %1562 = vmatprep.subr.bf16.mxu0 %v1531
    %1563 = vmatpush1.bf16.msra.mxu0 %v1530
    %1564 = vmatprep.subr.bf16.mxu0 %v1533
    %1565 = vmatpush1.bf16.msra.mxu0 %v1532
    %1566 = vmatprep.subr.bf16.mxu0 %v1535
    %1567 = vmatpush1.bf16.msra.mxu0 %v1534
    %1568 = vmatprep.subr.bf16.mxu0 %v1537
    %1569 = vmatpush1.bf16.msra.mxu0 %v1536
    %1570 = vmatprep.subr.bf16.mxu0 0
    %1571 = vmatpush1.bf16.msra.mxu0 0
    %1572 = vmatprep.subr.bf16.mxu0 0
    %1573 = vmatpush1.bf16.msra.mxu0 0
    %1574 = vmatprep.subr.bf16.mxu0 0
    %1575 = vmatpush1.bf16.msra.mxu0 0
    %1576 = vmatprep.subr.bf16.mxu0 0
    %1577 = vmatpush1.bf16.msra.mxu0 0
    %1578 = vmatprep.subr.bf16.mxu0 0
    %1579 = vmatpush1.bf16.msra.mxu0 0
    %1580 = vmatprep.subr.bf16.mxu0 0
    %1581 = vmatpush1.bf16.msra.mxu0 0
    %1582 = vmatprep.subr.bf16.mxu0 0
    %1583 = vmatpush1.bf16.msra.mxu0 0
    %1584 = vmatprep.subr.bf16.mxu0 0
    %1585 = vmatpush1.bf16.msra.mxu0 0
    %1586 = vmatprep.mubr.bf16.mxu0 0
    %1587 = vmatmul.mubr.bf16.gmra.mrb[0].mxu0 %v1446
    %v1588 = vpop.f32.mrb[0].mxu0
    %v1589 = vadd.f32 %v1467, %v1588
    %v1590 = vpop.f32.mrb[0].mxu0
    %v1591 = vadd.f32 %v1471, %v1590
    %v1592 = vpop.f32.mrb[0].mxu0
    %v1593 = vpop.f32.mrb[0].mxu0
    %1594 = vdwg.mxu0
    %v1595 = vmax.f32 %v1589, 0.0
    %v1596 = vmax.f32 %v1591, 0.0
    %v1597 = vpack.c.bf16 %v1595, %v1595
    %v1598 = vpack.c.bf16 %v1596, %v1596
    %v1599 = vld [vmem:[#allocation11] sm:$0xff]
    %v1600 = vld [vmem:[#allocation11 + $0x8] sm:$0xff]
    %v1601 = vld [vmem:[#allocation11 + $0x10] sm:$0xff]
    %v1602 = vld [vmem:[#allocation11 + $0x18] sm:$0xff]
    %v1603 = vld [vmem:[#allocation11 + $0x20] sm:$0xff]
    %v1604 = vld [vmem:[#allocation11 + $0x28] sm:$0xff]
    %v1605 = vld [vmem:[#allocation11 + $0x30] sm:$0xff]
    %v1606 = vld [vmem:[#allocation11 + $0x38] sm:$0xff]
    %v1607 = vld [vmem:[#allocation11 + $0x40] sm:$0xff]
    %v1608 = vld [vmem:[#allocation11 + $0x48] sm:$0xff]
    %v1609 = vld [vmem:[#allocation11 + $0x50] sm:$0xff]
    %v1610 = vld [vmem:[#allocation11 + $0x58] sm:$0xff]
    %v1611 = vld [vmem:[#allocation11 + $0x60] sm:$0xff]
    %v1612 = vld [vmem:[#allocation11 + $0x68] sm:$0xff]
    %v1613 = vld [vmem:[#allocation11 + $0x70] sm:$0xff]
    %v1614 = vld [vmem:[#allocation11 + $0x78] sm:$0xff]
    %v1615 = vld [vmem:[#allocation11 + $0x80] sm:$0xff]
    %v1616 = vld [vmem:[#allocation11 + $0x88] sm:$0xff]
    %v1617 = vld [vmem:[#allocation11 + $0x90] sm:$0xff]
    %v1618 = vld [vmem:[#allocation11 + $0x98] sm:$0xff]
    %v1619 = vld [vmem:[#allocation11 + $0xa0] sm:$0xff]
    %v1620 = vld [vmem:[#allocation11 + $0xa8] sm:$0xff]
    %v1621 = vld [vmem:[#allocation11 + $0xb0] sm:$0xff]
    %v1622 = vld [vmem:[#allocation11 + $0xb8] sm:$0xff]
    %v1623 = vld [vmem:[#allocation11 + $0xc0] sm:$0xff]
    %v1624 = vld [vmem:[#allocation11 + $0xc8] sm:$0xff]
    %v1625 = vld [vmem:[#allocation11 + $0xd0] sm:$0xff]
    %v1626 = vld [vmem:[#allocation11 + $0xd8] sm:$0xff]
    %v1627 = vld [vmem:[#allocation11 + $0xe0] sm:$0xff]
    %v1628 = vld [vmem:[#allocation11 + $0xe8] sm:$0xff]
    %v1629 = vld [vmem:[#allocation11 + $0xf0] sm:$0xff]
    %v1630 = vld [vmem:[#allocation11 + $0xf8] sm:$0xff]
    %v1631 = vld [vmem:[#allocation11 + $0x100] sm:$0xff]
    %v1632 = vld [vmem:[#allocation11 + $0x108] sm:$0xff]
    %v1633 = vld [vmem:[#allocation11 + $0x110] sm:$0xff]
    %v1634 = vld [vmem:[#allocation11 + $0x118] sm:$0xff]
    %v1635 = vld [vmem:[#allocation11 + $0x120] sm:$0xff]
    %v1636 = vld [vmem:[#allocation11 + $0x128] sm:$0xff]
    %v1637 = vld [vmem:[#allocation11 + $0x130] sm:$0xff]
    %v1638 = vld [vmem:[#allocation11 + $0x138] sm:$0xff]
    %v1639 = vld [vmem:[#allocation11 + $0x140] sm:$0xff]
    %v1640 = vld [vmem:[#allocation11 + $0x148] sm:$0xff]
    %v1641 = vld [vmem:[#allocation11 + $0x150] sm:$0xff]
    %v1642 = vld [vmem:[#allocation11 + $0x158] sm:$0xff]
    %v1643 = vld [vmem:[#allocation11 + $0x160] sm:$0xff]
    %v1644 = vld [vmem:[#allocation11 + $0x168] sm:$0xff]
    %v1645 = vld [vmem:[#allocation11 + $0x170] sm:$0xff]
    %v1646 = vld [vmem:[#allocation11 + $0x178] sm:$0xff]
    %v1647 = vld [vmem:[#allocation11 + $0x180] sm:$0xff]
    %v1648 = vld [vmem:[#allocation11 + $0x188] sm:$0xff]
    %v1649 = vld [vmem:[#allocation11 + $0x190] sm:$0xff]
    %v1650 = vld [vmem:[#allocation11 + $0x198] sm:$0xff]
    %v1651 = vld [vmem:[#allocation11 + $0x1a0] sm:$0xff]
    %v1652 = vld [vmem:[#allocation11 + $0x1a8] sm:$0xff]
    %v1653 = vld [vmem:[#allocation11 + $0x1b0] sm:$0xff]
    %v1654 = vld [vmem:[#allocation11 + $0x1b8] sm:$0xff]
    %v1655 = vld [vmem:[#allocation11 + $0x1c0] sm:$0xff]
    %v1656 = vld [vmem:[#allocation11 + $0x1c8] sm:$0xff]
    %v1657 = vld [vmem:[#allocation11 + $0x1d0] sm:$0xff]
    %v1658 = vld [vmem:[#allocation11 + $0x1d8] sm:$0xff]
    %v1659 = vld [vmem:[#allocation11 + $0x1e0] sm:$0xff]
    %v1660 = vld [vmem:[#allocation11 + $0x1e8] sm:$0xff]
    %v1661 = vld [vmem:[#allocation11 + $0x1f0] sm:$0xff]
    %v1662 = vld [vmem:[#allocation11 + $0x1f8] sm:$0xff]
    %v1663 = vld [vmem:[#allocation11 + $0x200] sm:$0xff]
    %v1664 = vld [vmem:[#allocation11 + $0x208] sm:$0xff]
    %v1665 = vld [vmem:[#allocation11 + $0x210] sm:$0xff]
    %v1666 = vld [vmem:[#allocation11 + $0x218] sm:$0xff]
    %v1667 = vld [vmem:[#allocation11 + $0x220] sm:$0xff]
    %v1668 = vld [vmem:[#allocation11 + $0x228] sm:$0xff]
    %v1669 = vld [vmem:[#allocation11 + $0x230] sm:$0xff]
    %v1670 = vld [vmem:[#allocation11 + $0x238] sm:$0xff]
    %v1671 = vld [vmem:[#allocation11 + $0x240] sm:$0xff]
    %v1672 = vld [vmem:[#allocation11 + $0x248] sm:$0xff]
    %v1673 = vld [vmem:[#allocation11 + $0x250] sm:$0xff]
    %v1674 = vld [vmem:[#allocation11 + $0x258] sm:$0xff]
    %v1675 = vld [vmem:[#allocation11 + $0x260] sm:$0xff]
    %v1676 = vld [vmem:[#allocation11 + $0x268] sm:$0xff]
    %v1677 = vld [vmem:[#allocation11 + $0x270] sm:$0xff]
    %v1678 = vld [vmem:[#allocation11 + $0x278] sm:$0xff]
    %v1679 = vld [vmem:[#allocation11 + $0x280] sm:$0xff]
    %v1680 = vld [vmem:[#allocation11 + $0x288] sm:$0xff]
    %v1681 = vld [vmem:[#allocation11 + $0x290] sm:$0xff]
    %v1682 = vld [vmem:[#allocation11 + $0x298] sm:$0xff]
    %v1683 = vld [vmem:[#allocation11 + $0x2a0] sm:$0xff]
    %v1684 = vld [vmem:[#allocation11 + $0x2a8] sm:$0xff]
    %v1685 = vld [vmem:[#allocation11 + $0x2b0] sm:$0xff]
    %v1686 = vld [vmem:[#allocation11 + $0x2b8] sm:$0xff]
    %v1687 = vld [vmem:[#allocation11 + $0x2c0] sm:$0xff]
    %v1688 = vld [vmem:[#allocation11 + $0x2c8] sm:$0xff]
    %v1689 = vld [vmem:[#allocation11 + $0x2d0] sm:$0xff]
    %v1690 = vld [vmem:[#allocation11 + $0x2d8] sm:$0xff]
    %v1691 = vld [vmem:[#allocation11 + $0x2e0] sm:$0xff]
    %v1692 = vld [vmem:[#allocation11 + $0x2e8] sm:$0xff]
    %v1693 = vld [vmem:[#allocation11 + $0x2f0] sm:$0xff]
    %v1694 = vld [vmem:[#allocation11 + $0x2f8] sm:$0xff]
    %v1695 = vld [vmem:[#allocation11 + $0x300] sm:$0xff]
    %v1696 = vld [vmem:[#allocation11 + $0x308] sm:$0xff]
    %v1697 = vld [vmem:[#allocation11 + $0x310] sm:$0xff]
    %v1698 = vld [vmem:[#allocation11 + $0x318] sm:$0xff]
    %v1699 = vld [vmem:[#allocation11 + $0x320] sm:$0xff]
    %v1700 = vld [vmem:[#allocation11 + $0x328] sm:$0xff]
    %v1701 = vld [vmem:[#allocation11 + $0x330] sm:$0xff]
    %v1702 = vld [vmem:[#allocation11 + $0x338] sm:$0xff]
    %v1703 = vld [vmem:[#allocation11 + $0x340] sm:$0xff]
    %v1704 = vld [vmem:[#allocation11 + $0x348] sm:$0xff]
    %v1705 = vld [vmem:[#allocation11 + $0x350] sm:$0xff]
    %v1706 = vld [vmem:[#allocation11 + $0x358] sm:$0xff]
    %v1707 = vld [vmem:[#allocation11 + $0x360] sm:$0xff]
    %v1708 = vld [vmem:[#allocation11 + $0x368] sm:$0xff]
    %v1709 = vld [vmem:[#allocation11 + $0x370] sm:$0xff]
    %v1710 = vld [vmem:[#allocation11 + $0x378] sm:$0xff]
    %v1711 = vld [vmem:[#allocation11 + $0x380] sm:$0xff]
    %v1712 = vld [vmem:[#allocation11 + $0x388] sm:$0xff]
    %v1713 = vld [vmem:[#allocation11 + $0x390] sm:$0xff]
    %v1714 = vld [vmem:[#allocation11 + $0x398] sm:$0xff]
    %v1715 = vld [vmem:[#allocation11 + $0x3a0] sm:$0xff]
    %v1716 = vld [vmem:[#allocation11 + $0x3a8] sm:$0xff]
    %v1717 = vld [vmem:[#allocation11 + $0x3b0] sm:$0xff]
    %v1718 = vld [vmem:[#allocation11 + $0x3b8] sm:$0xff]
    %v1719 = vld [vmem:[#allocation11 + $0x3c0] sm:$0xff]
    %v1720 = vld [vmem:[#allocation11 + $0x3c8] sm:$0xff]
    %v1721 = vld [vmem:[#allocation11 + $0x3d0] sm:$0xff]
    %v1722 = vld [vmem:[#allocation11 + $0x3d8] sm:$0xff]
    %v1723 = vld [vmem:[#allocation11 + $0x3e0] sm:$0xff]
    %v1724 = vld [vmem:[#allocation11 + $0x3e8] sm:$0xff]
    %v1725 = vld [vmem:[#allocation11 + $0x3f0] sm:$0xff]
    %v1726 = vld [vmem:[#allocation11 + $0x3f8] sm:$0xff]
    %v1728 = vlaneseq
    %v1729 = vshrl.u32 %v1728, 7
    %v1730 = vsub.s32 0, %v1729
    %v1731 = vrot.slane %v112, %v1730
    %v1732 = vlaneseq
    %v1733 = vshrl.u32 %v1732, 7
    %v1734 = vsub.s32 1, %v1733
    %v1735 = vrot.slane %v112, %v1734
    %v1736 = vlaneseq
    %v1737 = vshrl.u32 %v1736, 7
    %v1738 = vsub.s32 2, %v1737
    %v1739 = vrot.slane %v112, %v1738
    %v1740 = vlaneseq
    %v1741 = vshrl.u32 %v1740, 7
    %v1742 = vsub.s32 3, %v1741
    %v1743 = vrot.slane %v112, %v1742
    %v1744 = vlaneseq
    %v1745 = vshrl.u32 %v1744, 7
    %v1746 = vsub.s32 4, %v1745
    %v1747 = vrot.slane %v112, %v1746
    %v1748 = vlaneseq
    %v1749 = vshrl.u32 %v1748, 7
    %v1750 = vsub.s32 5, %v1749
    %v1751 = vrot.slane %v112, %v1750
    %v1752 = vlaneseq
    %v1753 = vshrl.u32 %v1752, 7
    %v1754 = vsub.s32 6, %v1753
    %v1755 = vrot.slane %v112, %v1754
    %v1756 = vlaneseq
    %v1757 = vshrl.u32 %v1756, 7
    %v1758 = vsub.s32 7, %v1757
    %v1759 = vrot.slane %v112, %v1758
    %v1896 = vunpack.c.l.b16 %v1599
    %v1897 = vunpack.c.h.b16 %v1599
    %v1898 = vunpack.c.l.b16 %v1600
    %v1899 = vunpack.c.h.b16 %v1600
    %v1900 = vunpack.c.l.b16 %v1601
    %v1901 = vunpack.c.h.b16 %v1601
    %v1902 = vunpack.c.l.b16 %v1602
    %v1903 = vunpack.c.h.b16 %v1602
    %v1904 = vunpack.c.l.b16 %v1603
    %v1905 = vunpack.c.h.b16 %v1603
    %v1906 = vunpack.c.l.b16 %v1604
    %v1907 = vunpack.c.h.b16 %v1604
    %v1908 = vunpack.c.l.b16 %v1605
    %v1909 = vunpack.c.h.b16 %v1605
    %v1910 = vunpack.c.l.b16 %v1606
    %v1911 = vunpack.c.h.b16 %v1606
    %v1912 = vunpack.c.l.b16 %v1607
    %v1913 = vunpack.c.h.b16 %v1607
    %v1914 = vunpack.c.l.b16 %v1608
    %v1915 = vunpack.c.h.b16 %v1608
    %v1916 = vunpack.c.l.b16 %v1609
    %v1917 = vunpack.c.h.b16 %v1609
    %v1918 = vunpack.c.l.b16 %v1610
    %v1919 = vunpack.c.h.b16 %v1610
    %v1920 = vunpack.c.l.b16 %v1611
    %v1921 = vunpack.c.h.b16 %v1611
    %v1922 = vunpack.c.l.b16 %v1612
    %v1923 = vunpack.c.h.b16 %v1612
    %v1924 = vunpack.c.l.b16 %v1613
    %v1925 = vunpack.c.h.b16 %v1613
    %v1926 = vunpack.c.l.b16 %v1614
    %v1927 = vunpack.c.h.b16 %v1614
    %v1928 = vunpack.c.l.b16 %v1615
    %v1929 = vunpack.c.h.b16 %v1615
    %v1930 = vunpack.c.l.b16 %v1616
    %v1931 = vunpack.c.h.b16 %v1616
    %v1932 = vunpack.c.l.b16 %v1617
    %v1933 = vunpack.c.h.b16 %v1617
    %v1934 = vunpack.c.l.b16 %v1618
    %v1935 = vunpack.c.h.b16 %v1618
    %v1936 = vunpack.c.l.b16 %v1619
    %v1937 = vunpack.c.h.b16 %v1619
    %v1938 = vunpack.c.l.b16 %v1620
    %v1939 = vunpack.c.h.b16 %v1620
    %v1940 = vunpack.c.l.b16 %v1621
    %v1941 = vunpack.c.h.b16 %v1621
    %v1942 = vunpack.c.l.b16 %v1622
    %v1943 = vunpack.c.h.b16 %v1622
    %v1944 = vunpack.c.l.b16 %v1623
    %v1945 = vunpack.c.h.b16 %v1623
    %v1946 = vunpack.c.l.b16 %v1624
    %v1947 = vunpack.c.h.b16 %v1624
    %v1948 = vunpack.c.l.b16 %v1625
    %v1949 = vunpack.c.h.b16 %v1625
    %v1950 = vunpack.c.l.b16 %v1626
    %v1951 = vunpack.c.h.b16 %v1626
    %v1952 = vunpack.c.l.b16 %v1627
    %v1953 = vunpack.c.h.b16 %v1627
    %v1954 = vunpack.c.l.b16 %v1628
    %v1955 = vunpack.c.h.b16 %v1628
    %v1956 = vunpack.c.l.b16 %v1629
    %v1957 = vunpack.c.h.b16 %v1629
    %v1958 = vunpack.c.l.b16 %v1630
    %v1959 = vunpack.c.h.b16 %v1630
    %v1960 = vunpack.c.l.b16 %v1631
    %v1961 = vunpack.c.h.b16 %v1631
    %v1962 = vunpack.c.l.b16 %v1632
    %v1963 = vunpack.c.h.b16 %v1632
    %v1964 = vunpack.c.l.b16 %v1633
    %v1965 = vunpack.c.h.b16 %v1633
    %v1966 = vunpack.c.l.b16 %v1634
    %v1967 = vunpack.c.h.b16 %v1634
    %v1968 = vunpack.c.l.b16 %v1635
    %v1969 = vunpack.c.h.b16 %v1635
    %v1970 = vunpack.c.l.b16 %v1636
    %v1971 = vunpack.c.h.b16 %v1636
    %v1972 = vunpack.c.l.b16 %v1637
    %v1973 = vunpack.c.h.b16 %v1637
    %v1974 = vunpack.c.l.b16 %v1638
    %v1975 = vunpack.c.h.b16 %v1638
    %v1976 = vunpack.c.l.b16 %v1639
    %v1977 = vunpack.c.h.b16 %v1639
    %v1978 = vunpack.c.l.b16 %v1640
    %v1979 = vunpack.c.h.b16 %v1640
    %v1980 = vunpack.c.l.b16 %v1641
    %v1981 = vunpack.c.h.b16 %v1641
    %v1982 = vunpack.c.l.b16 %v1642
    %v1983 = vunpack.c.h.b16 %v1642
    %v1984 = vunpack.c.l.b16 %v1643
    %v1985 = vunpack.c.h.b16 %v1643
    %v1986 = vunpack.c.l.b16 %v1644
    %v1987 = vunpack.c.h.b16 %v1644
    %v1988 = vunpack.c.l.b16 %v1645
    %v1989 = vunpack.c.h.b16 %v1645
    %v1990 = vunpack.c.l.b16 %v1646
    %v1991 = vunpack.c.h.b16 %v1646
    %v1992 = vunpack.c.l.b16 %v1647
    %v1993 = vunpack.c.h.b16 %v1647
    %v1994 = vunpack.c.l.b16 %v1648
    %v1995 = vunpack.c.h.b16 %v1648
    %v1996 = vunpack.c.l.b16 %v1649
    %v1997 = vunpack.c.h.b16 %v1649
    %v1998 = vunpack.c.l.b16 %v1650
    %v1999 = vunpack.c.h.b16 %v1650
    %v2000 = vunpack.c.l.b16 %v1651
    %v2001 = vunpack.c.h.b16 %v1651
    %v2002 = vunpack.c.l.b16 %v1652
    %v2003 = vunpack.c.h.b16 %v1652
    %v2004 = vunpack.c.l.b16 %v1653
    %v2005 = vunpack.c.h.b16 %v1653
    %v2006 = vunpack.c.l.b16 %v1654
    %v2007 = vunpack.c.h.b16 %v1654
    %v2008 = vunpack.c.l.b16 %v1655
    %v2009 = vunpack.c.h.b16 %v1655
    %v2010 = vunpack.c.l.b16 %v1656
    %v2011 = vunpack.c.h.b16 %v1656
    %v2012 = vunpack.c.l.b16 %v1657
    %v2013 = vunpack.c.h.b16 %v1657
    %v2014 = vunpack.c.l.b16 %v1658
    %v2015 = vunpack.c.h.b16 %v1658
    %v2016 = vunpack.c.l.b16 %v1659
    %v2017 = vunpack.c.h.b16 %v1659
    %v2018 = vunpack.c.l.b16 %v1660
    %v2019 = vunpack.c.h.b16 %v1660
    %v2020 = vunpack.c.l.b16 %v1661
    %v2021 = vunpack.c.h.b16 %v1661
    %v2022 = vunpack.c.l.b16 %v1662
    %v2023 = vunpack.c.h.b16 %v1662
    %v2024 = vunpack.c.l.b16 %v1663
    %v2025 = vunpack.c.h.b16 %v1663
    %v2026 = vunpack.c.l.b16 %v1664
    %v2027 = vunpack.c.h.b16 %v1664
    %v2028 = vunpack.c.l.b16 %v1665
    %v2029 = vunpack.c.h.b16 %v1665
    %v2030 = vunpack.c.l.b16 %v1666
    %v2031 = vunpack.c.h.b16 %v1666
    %v2032 = vunpack.c.l.b16 %v1667
    %v2033 = vunpack.c.h.b16 %v1667
    %v2034 = vunpack.c.l.b16 %v1668
    %v2035 = vunpack.c.h.b16 %v1668
    %v2036 = vunpack.c.l.b16 %v1669
    %v2037 = vunpack.c.h.b16 %v1669
    %v2038 = vunpack.c.l.b16 %v1670
    %v2039 = vunpack.c.h.b16 %v1670
    %v2040 = vunpack.c.l.b16 %v1671
    %v2041 = vunpack.c.h.b16 %v1671
    %v2042 = vunpack.c.l.b16 %v1672
    %v2043 = vunpack.c.h.b16 %v1672
    %v2044 = vunpack.c.l.b16 %v1673
    %v2045 = vunpack.c.h.b16 %v1673
    %v2046 = vunpack.c.l.b16 %v1674
    %v2047 = vunpack.c.h.b16 %v1674
    %v2048 = vunpack.c.l.b16 %v1675
    %v2049 = vunpack.c.h.b16 %v1675
    %v2050 = vunpack.c.l.b16 %v1676
    %v2051 = vunpack.c.h.b16 %v1676
    %v2052 = vunpack.c.l.b16 %v1677
    %v2053 = vunpack.c.h.b16 %v1677
    %v2054 = vunpack.c.l.b16 %v1678
    %v2055 = vunpack.c.h.b16 %v1678
    %v2056 = vunpack.c.l.b16 %v1679
    %v2057 = vunpack.c.h.b16 %v1679
    %v2058 = vunpack.c.l.b16 %v1680
    %v2059 = vunpack.c.h.b16 %v1680
    %v2060 = vunpack.c.l.b16 %v1681
    %v2061 = vunpack.c.h.b16 %v1681
    %v2062 = vunpack.c.l.b16 %v1682
    %v2063 = vunpack.c.h.b16 %v1682
    %v2064 = vunpack.c.l.b16 %v1683
    %v2065 = vunpack.c.h.b16 %v1683
    %v2066 = vunpack.c.l.b16 %v1684
    %v2067 = vunpack.c.h.b16 %v1684
    %v2068 = vunpack.c.l.b16 %v1685
    %v2069 = vunpack.c.h.b16 %v1685
    %v2070 = vunpack.c.l.b16 %v1686
    %v2071 = vunpack.c.h.b16 %v1686
    %v2072 = vunpack.c.l.b16 %v1687
    %v2073 = vunpack.c.h.b16 %v1687
    %v2074 = vunpack.c.l.b16 %v1688
    %v2075 = vunpack.c.h.b16 %v1688
    %v2076 = vunpack.c.l.b16 %v1689
    %v2077 = vunpack.c.h.b16 %v1689
    %v2078 = vunpack.c.l.b16 %v1690
    %v2079 = vunpack.c.h.b16 %v1690
    %v2080 = vunpack.c.l.b16 %v1691
    %v2081 = vunpack.c.h.b16 %v1691
    %v2082 = vunpack.c.l.b16 %v1692
    %v2083 = vunpack.c.h.b16 %v1692
    %v2084 = vunpack.c.l.b16 %v1693
    %v2085 = vunpack.c.h.b16 %v1693
    %v2086 = vunpack.c.l.b16 %v1694
    %v2087 = vunpack.c.h.b16 %v1694
    %v2088 = vunpack.c.l.b16 %v1695
    %v2089 = vunpack.c.h.b16 %v1695
    %v2090 = vunpack.c.l.b16 %v1696
    %v2091 = vunpack.c.h.b16 %v1696
    %v2092 = vunpack.c.l.b16 %v1697
    %v2093 = vunpack.c.h.b16 %v1697
    %v2094 = vunpack.c.l.b16 %v1698
    %v2095 = vunpack.c.h.b16 %v1698
    %v2096 = vunpack.c.l.b16 %v1699
    %v2097 = vunpack.c.h.b16 %v1699
    %v2098 = vunpack.c.l.b16 %v1700
    %v2099 = vunpack.c.h.b16 %v1700
    %v2100 = vunpack.c.l.b16 %v1701
    %v2101 = vunpack.c.h.b16 %v1701
    %v2102 = vunpack.c.l.b16 %v1702
    %v2103 = vunpack.c.h.b16 %v1702
    %v2104 = vunpack.c.l.b16 %v1703
    %v2105 = vunpack.c.h.b16 %v1703
    %v2106 = vunpack.c.l.b16 %v1704
    %v2107 = vunpack.c.h.b16 %v1704
    %v2108 = vunpack.c.l.b16 %v1705
    %v2109 = vunpack.c.h.b16 %v1705
    %v2110 = vunpack.c.l.b16 %v1706
    %v2111 = vunpack.c.h.b16 %v1706
    %v2112 = vunpack.c.l.b16 %v1707
    %v2113 = vunpack.c.h.b16 %v1707
    %v2114 = vunpack.c.l.b16 %v1708
    %v2115 = vunpack.c.h.b16 %v1708
    %v2116 = vunpack.c.l.b16 %v1709
    %v2117 = vunpack.c.h.b16 %v1709
    %v2118 = vunpack.c.l.b16 %v1710
    %v2119 = vunpack.c.h.b16 %v1710
    %v2120 = vunpack.c.l.b16 %v1711
    %v2121 = vunpack.c.h.b16 %v1711
    %v2122 = vunpack.c.l.b16 %v1712
    %v2123 = vunpack.c.h.b16 %v1712
    %v2124 = vunpack.c.l.b16 %v1713
    %v2125 = vunpack.c.h.b16 %v1713
    %v2126 = vunpack.c.l.b16 %v1714
    %v2127 = vunpack.c.h.b16 %v1714
    %v2128 = vunpack.c.l.b16 %v1715
    %v2129 = vunpack.c.h.b16 %v1715
    %v2130 = vunpack.c.l.b16 %v1716
    %v2131 = vunpack.c.h.b16 %v1716
    %v2132 = vunpack.c.l.b16 %v1717
    %v2133 = vunpack.c.h.b16 %v1717
    %v2134 = vunpack.c.l.b16 %v1718
    %v2135 = vunpack.c.h.b16 %v1718
    %v2136 = vunpack.c.l.b16 %v1719
    %v2137 = vunpack.c.h.b16 %v1719
    %v2138 = vunpack.c.l.b16 %v1720
    %v2139 = vunpack.c.h.b16 %v1720
    %v2140 = vunpack.c.l.b16 %v1721
    %v2141 = vunpack.c.h.b16 %v1721
    %v2142 = vunpack.c.l.b16 %v1722
    %v2143 = vunpack.c.h.b16 %v1722
    %v2144 = vunpack.c.l.b16 %v1723
    %v2145 = vunpack.c.h.b16 %v1723
    %v2146 = vunpack.c.l.b16 %v1724
    %v2147 = vunpack.c.h.b16 %v1724
    %v2148 = vunpack.c.l.b16 %v1725
    %v2149 = vunpack.c.h.b16 %v1725
    %v2150 = vunpack.c.l.b16 %v1726
    %v2151 = vunpack.c.h.b16 %v1726
    %v2152 = vpack.c.b16 %v1904, %v1896
    %v2153 = vpack.c.b16 %v1905, %v1897
    %v2154 = vpack.c.b16 %v1906, %v1898
    %v2155 = vpack.c.b16 %v1907, %v1899
    %v2156 = vpack.c.b16 %v1908, %v1900
    %v2157 = vpack.c.b16 %v1909, %v1901
    %v2158 = vpack.c.b16 %v1910, %v1902
    %v2159 = vpack.c.b16 %v1911, %v1903
    %v2160 = vpack.c.b16 %v1920, %v1912
    %v2161 = vpack.c.b16 %v1921, %v1913
    %v2162 = vpack.c.b16 %v1922, %v1914
    %v2163 = vpack.c.b16 %v1923, %v1915
    %v2164 = vpack.c.b16 %v1924, %v1916
    %v2165 = vpack.c.b16 %v1925, %v1917
    %v2166 = vpack.c.b16 %v1926, %v1918
    %v2167 = vpack.c.b16 %v1927, %v1919
    %v2168 = vpack.c.b16 %v1936, %v1928
    %v2169 = vpack.c.b16 %v1937, %v1929
    %v2170 = vpack.c.b16 %v1938, %v1930
    %v2171 = vpack.c.b16 %v1939, %v1931
    %v2172 = vpack.c.b16 %v1940, %v1932
    %v2173 = vpack.c.b16 %v1941, %v1933
    %v2174 = vpack.c.b16 %v1942, %v1934
    %v2175 = vpack.c.b16 %v1943, %v1935
    %v2176 = vpack.c.b16 %v1952, %v1944
    %v2177 = vpack.c.b16 %v1953, %v1945
    %v2178 = vpack.c.b16 %v1954, %v1946
    %v2179 = vpack.c.b16 %v1955, %v1947
    %v2180 = vpack.c.b16 %v1956, %v1948
    %v2181 = vpack.c.b16 %v1957, %v1949
    %v2182 = vpack.c.b16 %v1958, %v1950
    %v2183 = vpack.c.b16 %v1959, %v1951
    %v2184 = vpack.c.b16 %v1968, %v1960
    %v2185 = vpack.c.b16 %v1969, %v1961
    %v2186 = vpack.c.b16 %v1970, %v1962
    %v2187 = vpack.c.b16 %v1971, %v1963
    %v2188 = vpack.c.b16 %v1972, %v1964
    %v2189 = vpack.c.b16 %v1973, %v1965
    %v2190 = vpack.c.b16 %v1974, %v1966
    %v2191 = vpack.c.b16 %v1975, %v1967
    %v2192 = vpack.c.b16 %v1984, %v1976
    %v2193 = vpack.c.b16 %v1985, %v1977
    %v2194 = vpack.c.b16 %v1986, %v1978
    %v2195 = vpack.c.b16 %v1987, %v1979
    %v2196 = vpack.c.b16 %v1988, %v1980
    %v2197 = vpack.c.b16 %v1989, %v1981
    %v2198 = vpack.c.b16 %v1990, %v1982
    %v2199 = vpack.c.b16 %v1991, %v1983
    %v2200 = vpack.c.b16 %v2000, %v1992
    %v2201 = vpack.c.b16 %v2001, %v1993
    %v2202 = vpack.c.b16 %v2002, %v1994
    %v2203 = vpack.c.b16 %v2003, %v1995
    %v2204 = vpack.c.b16 %v2004, %v1996
    %v2205 = vpack.c.b16 %v2005, %v1997
    %v2206 = vpack.c.b16 %v2006, %v1998
    %v2207 = vpack.c.b16 %v2007, %v1999
    %v2208 = vpack.c.b16 %v2016, %v2008
    %v2209 = vpack.c.b16 %v2017, %v2009
    %v2210 = vpack.c.b16 %v2018, %v2010
    %v2211 = vpack.c.b16 %v2019, %v2011
    %v2212 = vpack.c.b16 %v2020, %v2012
    %v2213 = vpack.c.b16 %v2021, %v2013
    %v2214 = vpack.c.b16 %v2022, %v2014
    %v2215 = vpack.c.b16 %v2023, %v2015
    %v2216 = vpack.c.b16 %v2032, %v2024
    %v2217 = vpack.c.b16 %v2033, %v2025
    %v2218 = vpack.c.b16 %v2034, %v2026
    %v2219 = vpack.c.b16 %v2035, %v2027
    %v2220 = vpack.c.b16 %v2036, %v2028
    %v2221 = vpack.c.b16 %v2037, %v2029
    %v2222 = vpack.c.b16 %v2038, %v2030
    %v2223 = vpack.c.b16 %v2039, %v2031
    %v2224 = vpack.c.b16 %v2048, %v2040
    %v2225 = vpack.c.b16 %v2049, %v2041
    %v2226 = vpack.c.b16 %v2050, %v2042
    %v2227 = vpack.c.b16 %v2051, %v2043
    %v2228 = vpack.c.b16 %v2052, %v2044
    %v2229 = vpack.c.b16 %v2053, %v2045
    %v2230 = vpack.c.b16 %v2054, %v2046
    %v2231 = vpack.c.b16 %v2055, %v2047
    %v2232 = vpack.c.b16 %v2064, %v2056
    %v2233 = vpack.c.b16 %v2065, %v2057
    %v2234 = vpack.c.b16 %v2066, %v2058
    %v2235 = vpack.c.b16 %v2067, %v2059
    %v2236 = vpack.c.b16 %v2068, %v2060
    %v2237 = vpack.c.b16 %v2069, %v2061
    %v2238 = vpack.c.b16 %v2070, %v2062
    %v2239 = vpack.c.b16 %v2071, %v2063
    %v2240 = vpack.c.b16 %v2080, %v2072
    %v2241 = vpack.c.b16 %v2081, %v2073
    %v2242 = vpack.c.b16 %v2082, %v2074
    %v2243 = vpack.c.b16 %v2083, %v2075
    %v2244 = vpack.c.b16 %v2084, %v2076
    %v2245 = vpack.c.b16 %v2085, %v2077
    %v2246 = vpack.c.b16 %v2086, %v2078
    %v2247 = vpack.c.b16 %v2087, %v2079
    %v2248 = vpack.c.b16 %v2096, %v2088
    %v2249 = vpack.c.b16 %v2097, %v2089
    %v2250 = vpack.c.b16 %v2098, %v2090
    %v2251 = vpack.c.b16 %v2099, %v2091
    %v2252 = vpack.c.b16 %v2100, %v2092
    %v2253 = vpack.c.b16 %v2101, %v2093
    %v2254 = vpack.c.b16 %v2102, %v2094
    %v2255 = vpack.c.b16 %v2103, %v2095
    %v2256 = vpack.c.b16 %v2112, %v2104
    %v2257 = vpack.c.b16 %v2113, %v2105
    %v2258 = vpack.c.b16 %v2114, %v2106
    %v2259 = vpack.c.b16 %v2115, %v2107
    %v2260 = vpack.c.b16 %v2116, %v2108
    %v2261 = vpack.c.b16 %v2117, %v2109
    %v2262 = vpack.c.b16 %v2118, %v2110
    %v2263 = vpack.c.b16 %v2119, %v2111
    %v2264 = vpack.c.b16 %v2128, %v2120
    %v2265 = vpack.c.b16 %v2129, %v2121
    %v2266 = vpack.c.b16 %v2130, %v2122
    %v2267 = vpack.c.b16 %v2131, %v2123
    %v2268 = vpack.c.b16 %v2132, %v2124
    %v2269 = vpack.c.b16 %v2133, %v2125
    %v2270 = vpack.c.b16 %v2134, %v2126
    %v2271 = vpack.c.b16 %v2135, %v2127
    %v2272 = vpack.c.b16 %v2144, %v2136
    %v2273 = vpack.c.b16 %v2145, %v2137
    %v2274 = vpack.c.b16 %v2146, %v2138
    %v2275 = vpack.c.b16 %v2147, %v2139
    %v2276 = vpack.c.b16 %v2148, %v2140
    %v2277 = vpack.c.b16 %v2149, %v2141
    %v2278 = vpack.c.b16 %v2150, %v2142
    %v2279 = vpack.c.b16 %v2151, %v2143
    %2408 = vmatprep.subr.bf16.mxu0 %v2153
    %2409 = vmatpush1.bf16.msra.mxu0 %v2152
    %2410 = vmatprep.subr.bf16.mxu0 %v2161
    %2411 = vmatpush1.bf16.msra.mxu0 %v2160
    %2412 = vmatprep.subr.bf16.mxu0 %v2169
    %2413 = vmatpush1.bf16.msra.mxu0 %v2168
    %2414 = vmatprep.subr.bf16.mxu0 %v2177
    %2415 = vmatpush1.bf16.msra.mxu0 %v2176
    %2416 = vmatprep.subr.bf16.mxu0 %v2185
    %2417 = vmatpush1.bf16.msra.mxu0 %v2184
    %2418 = vmatprep.subr.bf16.mxu0 %v2193
    %2419 = vmatpush1.bf16.msra.mxu0 %v2192
    %2420 = vmatprep.subr.bf16.mxu0 %v2201
    %2421 = vmatpush1.bf16.msra.mxu0 %v2200
    %2422 = vmatprep.subr.bf16.mxu0 %v2209
    %2423 = vmatpush1.bf16.msra.mxu0 %v2208
    %2424 = vmatprep.subr.bf16.mxu0 %v2217
    %2425 = vmatpush1.bf16.msra.mxu0 %v2216
    %2426 = vmatprep.subr.bf16.mxu0 %v2225
    %2427 = vmatpush1.bf16.msra.mxu0 %v2224
    %2428 = vmatprep.subr.bf16.mxu0 %v2233
    %2429 = vmatpush1.bf16.msra.mxu0 %v2232
    %2430 = vmatprep.subr.bf16.mxu0 %v2241
    %2431 = vmatpush1.bf16.msra.mxu0 %v2240
    %2432 = vmatprep.subr.bf16.mxu0 %v2249
    %2433 = vmatpush1.bf16.msra.mxu0 %v2248
    %2434 = vmatprep.subr.bf16.mxu0 %v2257
    %2435 = vmatpush1.bf16.msra.mxu0 %v2256
    %2436 = vmatprep.subr.bf16.mxu0 %v2265
    %2437 = vmatpush1.bf16.msra.mxu0 %v2264
    %2438 = vmatprep.subr.bf16.mxu0 %v2273
    %2439 = vmatpush1.bf16.msra.mxu0 %v2272
    %2440 = vmatprep.mubr.bf16.mxu0 %v1598
    %2441 = vmatmul.mubr.bf16.gmra.mrb[0].mxu0 %v1597
    %v2442 = vpop.f32.mrb[0].mxu0
    %v2443 = vadd.f32 %v1731, %v2442
    %v2444 = vpop.f32.mrb[0].mxu0
    %v2445 = vadd.f32 %v1735, %v2444
    %v2446 = vpop.f32.mrb[0].mxu0
    %v2447 = vpop.f32.mrb[0].mxu0
    %2448 = vdwg.mxu0
    %2449 = vmatprep.subr.bf16.mxu0 %v2155
    %2450 = vmatpush1.bf16.msra.mxu0 %v2154
    %2451 = vmatprep.subr.bf16.mxu0 %v2163
    %2452 = vmatpush1.bf16.msra.mxu0 %v2162
    %2453 = vmatprep.subr.bf16.mxu0 %v2171
    %2454 = vmatpush1.bf16.msra.mxu0 %v2170
    %2455 = vmatprep.subr.bf16.mxu0 %v2179
    %2456 = vmatpush1.bf16.msra.mxu0 %v2178
    %2457 = vmatprep.subr.bf16.mxu0 %v2187
    %2458 = vmatpush1.bf16.msra.mxu0 %v2186
    %2459 = vmatprep.subr.bf16.mxu0 %v2195
    %2460 = vmatpush1.bf16.msra.mxu0 %v2194
    %2461 = vmatprep.subr.bf16.mxu0 %v2203
    %2462 = vmatpush1.bf16.msra.mxu0 %v2202
    %2463 = vmatprep.subr.bf16.mxu0 %v2211
    %2464 = vmatpush1.bf16.msra.mxu0 %v2210
    %2465 = vmatprep.subr.bf16.mxu0 %v2219
    %2466 = vmatpush1.bf16.msra.mxu0 %v2218
    %2467 = vmatprep.subr.bf16.mxu0 %v2227
    %2468 = vmatpush1.bf16.msra.mxu0 %v2226
    %2469 = vmatprep.subr.bf16.mxu0 %v2235
    %2470 = vmatpush1.bf16.msra.mxu0 %v2234
    %2471 = vmatprep.subr.bf16.mxu0 %v2243
    %2472 = vmatpush1.bf16.msra.mxu0 %v2242
    %2473 = vmatprep.subr.bf16.mxu0 %v2251
    %2474 = vmatpush1.bf16.msra.mxu0 %v2250
    %2475 = vmatprep.subr.bf16.mxu0 %v2259
    %2476 = vmatpush1.bf16.msra.mxu0 %v2258
    %2477 = vmatprep.subr.bf16.mxu0 %v2267
    %2478 = vmatpush1.bf16.msra.mxu0 %v2266
    %2479 = vmatprep.subr.bf16.mxu0 %v2275
    %2480 = vmatpush1.bf16.msra.mxu0 %v2274
    %2481 = vmatprep.mubr.bf16.mxu0 %v1598
    %2482 = vmatmul.mubr.bf16.gmra.mrb[0].mxu0 %v1597
    %v2483 = vpop.f32.mrb[0].mxu0
    %v2484 = vadd.f32 %v1739, %v2483
    %v2485 = vpop.f32.mrb[0].mxu0
    %v2486 = vadd.f32 %v1743, %v2485
    %v2487 = vpop.f32.mrb[0].mxu0
    %v2488 = vpop.f32.mrb[0].mxu0
    %2489 = vdwg.mxu0
    %2490 = vmatprep.subr.bf16.mxu0 %v2157
    %2491 = vmatpush1.bf16.msra.mxu0 %v2156
    %2492 = vmatprep.subr.bf16.mxu0 %v2165
    %2493 = vmatpush1.bf16.msra.mxu0 %v2164
    %2494 = vmatprep.subr.bf16.mxu0 %v2173
    %2495 = vmatpush1.bf16.msra.mxu0 %v2172
    %2496 = vmatprep.subr.bf16.mxu0 %v2181
    %2497 = vmatpush1.bf16.msra.mxu0 %v2180
    %2498 = vmatprep.subr.bf16.mxu0 %v2189
    %2499 = vmatpush1.bf16.msra.mxu0 %v2188
    %2500 = vmatprep.subr.bf16.mxu0 %v2197
    %2501 = vmatpush1.bf16.msra.mxu0 %v2196
    %2502 = vmatprep.subr.bf16.mxu0 %v2205
    %2503 = vmatpush1.bf16.msra.mxu0 %v2204
    %2504 = vmatprep.subr.bf16.mxu0 %v2213
    %2505 = vmatpush1.bf16.msra.mxu0 %v2212
    %2506 = vmatprep.subr.bf16.mxu0 %v2221
    %2507 = vmatpush1.bf16.msra.mxu0 %v2220
    %2508 = vmatprep.subr.bf16.mxu0 %v2229
    %2509 = vmatpush1.bf16.msra.mxu0 %v2228
    %2510 = vmatprep.subr.bf16.mxu0 %v2237
    %2511 = vmatpush1.bf16.msra.mxu0 %v2236
    %2512 = vmatprep.subr.bf16.mxu0 %v2245
    %2513 = vmatpush1.bf16.msra.mxu0 %v2244
    %2514 = vmatprep.subr.bf16.mxu0 %v2253
    %2515 = vmatpush1.bf16.msra.mxu0 %v2252
    %2516 = vmatprep.subr.bf16.mxu0 %v2261
    %2517 = vmatpush1.bf16.msra.mxu0 %v2260
    %2518 = vmatprep.subr.bf16.mxu0 %v2269
    %2519 = vmatpush1.bf16.msra.mxu0 %v2268
    %2520 = vmatprep.subr.bf16.mxu0 %v2277
    %2521 = vmatpush1.bf16.msra.mxu0 %v2276
    %2522 = vmatprep.mubr.bf16.mxu0 %v1598
    %2523 = vmatmul.mubr.bf16.gmra.mrb[0].mxu0 %v1597
    %v2524 = vpop.f32.mrb[0].mxu0
    %v2525 = vadd.f32 %v1747, %v2524
    %v2526 = vpop.f32.mrb[0].mxu0
    %v2527 = vadd.f32 %v1751, %v2526
    %v2528 = vpop.f32.mrb[0].mxu0
    %v2529 = vpop.f32.mrb[0].mxu0
    %2530 = vdwg.mxu0
    %2531 = vmatprep.subr.bf16.mxu0 %v2159
    %2532 = vmatpush1.bf16.msra.mxu0 %v2158
    %2533 = vmatprep.subr.bf16.mxu0 %v2167
    %2534 = vmatpush1.bf16.msra.mxu0 %v2166
    %2535 = vmatprep.subr.bf16.mxu0 %v2175
    %2536 = vmatpush1.bf16.msra.mxu0 %v2174
    %2537 = vmatprep.subr.bf16.mxu0 %v2183
    %2538 = vmatpush1.bf16.msra.mxu0 %v2182
    %2539 = vmatprep.subr.bf16.mxu0 %v2191
    %2540 = vmatpush1.bf16.msra.mxu0 %v2190
    %2541 = vmatprep.subr.bf16.mxu0 %v2199
    %2542 = vmatpush1.bf16.msra.mxu0 %v2198
    %2543 = vmatprep.subr.bf16.mxu0 %v2207
    %2544 = vmatpush1.bf16.msra.mxu0 %v2206
    %2545 = vmatprep.subr.bf16.mxu0 %v2215
    %2546 = vmatpush1.bf16.msra.mxu0 %v2214
    %2547 = vmatprep.subr.bf16.mxu0 %v2223
    %2548 = vmatpush1.bf16.msra.mxu0 %v2222
    %2549 = vmatprep.subr.bf16.mxu0 %v2231
    %2550 = vmatpush1.bf16.msra.mxu0 %v2230
    %2551 = vmatprep.subr.bf16.mxu0 %v2239
    %2552 = vmatpush1.bf16.msra.mxu0 %v2238
    %2553 = vmatprep.subr.bf16.mxu0 %v2247
    %2554 = vmatpush1.bf16.msra.mxu0 %v2246
    %2555 = vmatprep.subr.bf16.mxu0 %v2255
    %2556 = vmatpush1.bf16.msra.mxu0 %v2254
    %2557 = vmatprep.subr.bf16.mxu0 %v2263
    %2558 = vmatpush1.bf16.msra.mxu0 %v2262
    %2559 = vmatprep.subr.bf16.mxu0 %v2271
    %2560 = vmatpush1.bf16.msra.mxu0 %v2270
    %2561 = vmatprep.subr.bf16.mxu0 %v2279
    %2562 = vmatpush1.bf16.msra.mxu0 %v2278
    %2563 = vmatprep.mubr.bf16.mxu0 %v1598
    %2564 = vmatmul.mubr.bf16.gmra.mrb[0].mxu0 %v1597
    %v2565 = vpop.f32.mrb[0].mxu0
    %v2566 = vadd.f32 %v1755, %v2565
    %v2567 = vpop.f32.mrb[0].mxu0
    %v2568 = vadd.f32 %v1759, %v2567
    %v2569 = vpop.f32.mrb[0].mxu0
    %v2570 = vpop.f32.mrb[0].mxu0
    %2571 = vdwg.mxu0
    %vm2572 = vcmp.gt.f32.partialorder %v2443, 0.0
    %vm2573 = vcmp.gt.f32.partialorder %v2445, 0.0
    %vm2574 = vcmp.gt.f32.partialorder %v2484, 0.0
    %vm2575 = vcmp.gt.f32.partialorder %v2486, 0.0
    %vm2576 = vcmp.gt.f32.partialorder %v2525, 0.0
    %vm2577 = vcmp.gt.f32.partialorder %v2527, 0.0
    %vm2578 = vcmp.gt.f32.partialorder %v2566, 0.0
    %vm2579 = vcmp.gt.f32.partialorder %v2568, 0.0
    %v2580 = vmul.f32 %v2443, 0.1
    %v2581 = vmul.f32 %v2445, 0.1
    %v2582 = vmul.f32 %v2484, 0.1
    %v2583 = vmul.f32 %v2486, 0.1
    %v2584 = vmul.f32 %v2525, 0.1
    %v2585 = vmul.f32 %v2527, 0.1
    %v2586 = vmul.f32 %v2566, 0.1
    %v2587 = vmul.f32 %v2568, 0.1
    %v2588 = vsel %vm2572, %v2443, %v2580
    %v2589 = vsel %vm2573, %v2445, %v2581
    %v2590 = vsel %vm2574, %v2484, %v2582
    %v2591 = vsel %vm2575, %v2486, %v2583
    %v2592 = vsel %vm2576, %v2525, %v2584
    %v2593 = vsel %vm2577, %v2527, %v2585
    %v2594 = vsel %vm2578, %v2566, %v2586
    %v2595 = vsel %vm2579, %v2568, %v2587
    %vm2596 = vcmp.ne.f32.partialorder %v2588, %v2588
    %vm2597 = vcmp.ne.f32.partialorder %v2589, %v2589
    %vm2598 = vcmp.ne.f32.partialorder %v2590, %v2590
    %vm2599 = vcmp.ne.f32.partialorder %v2591, %v2591
    %vm2600 = vcmp.ne.f32.partialorder %v2592, %v2592
    %vm2601 = vcmp.ne.f32.partialorder %v2593, %v2593
    %vm2602 = vcmp.ne.f32.partialorder %v2594, %v2594
    %vm2603 = vcmp.ne.f32.partialorder %v2595, %v2595
    %v2604 = vsel %vm2596, 0.0, %v2588
    %v2605 = vsel %vm2597, 0.0, %v2589
    %v2606 = vsel %vm2598, 0.0, %v2590
    %v2607 = vsel %vm2599, 0.0, %v2591
    %v2608 = vsel %vm2600, 0.0, %v2592
    %v2609 = vsel %vm2601, 0.0, %v2593
    %v2610 = vsel %vm2602, 0.0, %v2594
    %v2611 = vsel %vm2603, 0.0, %v2595
    %vm2612 = vcmp.eq.f32.partialorder %v2604, inf
    %vm2613 = vcmp.eq.f32.partialorder %v2605, inf
    %vm2614 = vcmp.eq.f32.partialorder %v2606, inf
    %vm2615 = vcmp.eq.f32.partialorder %v2607, inf
    %vm2616 = vcmp.eq.f32.partialorder %v2608, inf
    %vm2617 = vcmp.eq.f32.partialorder %v2609, inf
    %vm2618 = vcmp.eq.f32.partialorder %v2610, inf
    %vm2619 = vcmp.eq.f32.partialorder %v2611, inf
    %v2620 = vsel %vm2612, 3.4028235e+38, %v2604
    %v2621 = vsel %vm2613, 3.4028235e+38, %v2605
    %v2622 = vsel %vm2614, 3.4028235e+38, %v2606
    %v2623 = vsel %vm2615, 3.4028235e+38, %v2607
    %v2624 = vsel %vm2616, 3.4028235e+38, %v2608
    %v2625 = vsel %vm2617, 3.4028235e+38, %v2609
    %v2626 = vsel %vm2618, 3.4028235e+38, %v2610
    %v2627 = vsel %vm2619, 3.4028235e+38, %v2611
    %vm2628 = vcmp.eq.f32.partialorder %v2620, -inf
    %vm2629 = vcmp.eq.f32.partialorder %v2621, -inf
    %vm2630 = vcmp.eq.f32.partialorder %v2622, -inf
    %vm2631 = vcmp.eq.f32.partialorder %v2623, -inf
    %vm2632 = vcmp.eq.f32.partialorder %v2624, -inf
    %vm2633 = vcmp.eq.f32.partialorder %v2625, -inf
    %vm2634 = vcmp.eq.f32.partialorder %v2626, -inf
    %vm2635 = vcmp.eq.f32.partialorder %v2627, -inf
    %v2636 = vsel %vm2628, -3.4028235e+38, %v2620
    %v2637 = vsel %vm2629, -3.4028235e+38, %v2621
    %v2638 = vsel %vm2630, -3.4028235e+38, %v2622
    %v2639 = vsel %vm2631, -3.4028235e+38, %v2623
    %v2640 = vsel %vm2632, -3.4028235e+38, %v2624
    %v2641 = vsel %vm2633, -3.4028235e+38, %v2625
    %v2642 = vsel %vm2634, -3.4028235e+38, %v2626
    %v2643 = vsel %vm2635, -3.4028235e+38, %v2627
    %v2645 = vlaneseq
    %v2646 = vshrl.u32 %v2645, 7
    %v2647 = vsub.s32 0, %v2646
    %v2648 = vrot.slane %v120, %v2647
    %v2649 = vlaneseq
    %v2650 = vshrl.u32 %v2649, 7
    %v2651 = vsub.s32 1, %v2650
    %v2652 = vrot.slane %v120, %v2651
    %v2653 = vlaneseq
    %v2654 = vshrl.u32 %v2653, 7
    %v2655 = vsub.s32 2, %v2654
    %v2656 = vrot.slane %v120, %v2655
    %v2657 = vlaneseq
    %v2658 = vshrl.u32 %v2657, 7
    %v2659 = vsub.s32 3, %v2658
    %v2660 = vrot.slane %v120, %v2659
    %v2661 = vlaneseq
    %v2662 = vshrl.u32 %v2661, 7
    %v2663 = vsub.s32 4, %v2662
    %v2664 = vrot.slane %v120, %v2663
    %v2665 = vlaneseq
    %v2666 = vshrl.u32 %v2665, 7
    %v2667 = vsub.s32 5, %v2666
    %v2668 = vrot.slane %v120, %v2667
    %v2669 = vlaneseq
    %v2670 = vshrl.u32 %v2669, 7
    %v2671 = vsub.s32 6, %v2670
    %v2672 = vrot.slane %v120, %v2671
    %v2673 = vlaneseq
    %v2674 = vshrl.u32 %v2673, 7
    %v2675 = vsub.s32 7, %v2674
    %v2676 = vrot.slane %v120, %v2675
    %v2685 = vmin.f32 %v2636, %v2648
    %v2686 = vmin.f32 %v2637, %v2652
    %v2687 = vmin.f32 %v2638, %v2656
    %v2688 = vmin.f32 %v2639, %v2660
    %v2689 = vmin.f32 %v2640, %v2664
    %v2690 = vmin.f32 %v2641, %v2668
    %v2691 = vmin.f32 %v2642, %v2672
    %v2692 = vmin.f32 %v2643, %v2676
    %v2694 = vlaneseq
    %v2695 = vshrl.u32 %v2694, 7
    %v2696 = vsub.s32 0, %v2695
    %v2697 = vrot.slane %v116, %v2696
    %v2698 = vlaneseq
    %v2699 = vshrl.u32 %v2698, 7
    %v2700 = vsub.s32 1, %v2699
    %v2701 = vrot.slane %v116, %v2700
    %v2702 = vlaneseq
    %v2703 = vshrl.u32 %v2702, 7
    %v2704 = vsub.s32 2, %v2703
    %v2705 = vrot.slane %v116, %v2704
    %v2706 = vlaneseq
    %v2707 = vshrl.u32 %v2706, 7
    %v2708 = vsub.s32 3, %v2707
    %v2709 = vrot.slane %v116, %v2708
    %v2710 = vlaneseq
    %v2711 = vshrl.u32 %v2710, 7
    %v2712 = vsub.s32 4, %v2711
    %v2713 = vrot.slane %v116, %v2712
    %v2714 = vlaneseq
    %v2715 = vshrl.u32 %v2714, 7
    %v2716 = vsub.s32 5, %v2715
    %v2717 = vrot.slane %v116, %v2716
    %v2718 = vlaneseq
    %v2719 = vshrl.u32 %v2718, 7
    %v2720 = vsub.s32 6, %v2719
    %v2721 = vrot.slane %v116, %v2720
    %v2722 = vlaneseq
    %v2723 = vshrl.u32 %v2722, 7
    %v2724 = vsub.s32 7, %v2723
    %v2725 = vrot.slane %v116, %v2724
    %v2734 = vmax.f32 %v2685, %v2697
    %v2735 = vmax.f32 %v2686, %v2701
    %v2736 = vmax.f32 %v2687, %v2705
    %v2737 = vmax.f32 %v2688, %v2709
    %v2738 = vmax.f32 %v2689, %v2713
    %v2739 = vmax.f32 %v2690, %v2717
    %v2740 = vmax.f32 %v2691, %v2721
    %v2741 = vmax.f32 %v2692, %v2725
    %2742 = vst [vmem:[#allocation13] sm:$0xff] %v2734
    %2743 = vst [vmem:[#allocation13 + $0x8] sm:$0xff] %v2735
    %2744 = vst [vmem:[#allocation13 + $0x10] sm:$0xff] %v2736
    %2745 = vst [vmem:[#allocation13 + $0x18] sm:$0xff] %v2737
    %2746 = vst [vmem:[#allocation13 + $0x20] sm:$0xff] %v2738
    %2747 = vst [vmem:[#allocation13 + $0x28] sm:$0xff] %v2739
    %2748 = vst [vmem:[#allocation13 + $0x30] sm:$0xff] %v2740
    %2749 = vst [vmem:[#allocation13 + $0x38] sm:$0xff] %v2741
    // Predicated region
    $region50: #{tpu_custom_call.1} parent=1 // pred_check
      _
    $region51: #{tpu_custom_call.1} parent=1 // pred_check_branch
      %2751 = sbr.rel (0) target = $region53
    $region52: #{tpu_custom_call.1} parent=1 // pred_region
      %s2753 = ssub.s32 1024, 1024
      %2754 = vsyncadd [#allocation4], %s2753
      %s2756 = sshll.u32 [#allocation13], 4
      %s2757 = int_to_ptr.vmem [resolvable:$true] %s2756
      %2759 = dma.vmem_to_hbm [thread:$0]  %s2757, 1024, %s6, [#allocation4]
    $region53: #{tpu_custom_call.1} parent=1 // pred_fallthru
      _
    // Predicated region
    $region54: #{tpu_custom_call.1} parent=1 // pred_check
      _
    $region55: #{tpu_custom_call.1} parent=1 // pred_check_branch
      %2761 = sbr.rel (0) target = $region57
    $region56: #{tpu_custom_call.1} parent=1 // pred_region
      %2762 = dma.done [#allocation4], 1024
    $region57: #{tpu_custom_call.1} parent=1 // pred_fallthru
      _
    %2763 = vsyncpa [#allocation3], 1
    %2764 = vsyncpa [#allocation6], 1
    %2765 = vsyncpa [#allocation9], 1
    %2766 = vsyncpa [#allocation12], 1
    %2767 = vsyncpa [#allocation4], 1

</llo_original>
